<compile_context>
chip_gen: v5e
topology: v5e:2x2
jax: 0.10.0
libtpu: 0.0.40
codegen_flags: <defaults>
</compile_context>

<pallas_src>
import math
from functools import partial

import jax
import jax.numpy as jnp
from jax import lax
from jax.experimental import pallas as pl
from jax.experimental.pallas import tpu as pltpu


def _prelu(y, a):
    # PReLU: max(0, y) + a * min(0, y)
    return jnp.where(y >= 0, y, a * y)


def asa_kernel(x_ref, w_all_ref, wp_ref, pslab_ref, o_ref, *,
               d_c, Fdim, Tdim, causal):
    d = d_c
    C = x_ref.shape[1]

    xm = x_ref[0]                                        # (C, F*T)  lane-dense
    w_all = w_all_ref[...]                               # (5*d_c, C)
    ps = pslab_ref[...]                                  # (5*d_c, 4)
    b_all = ps[0:5 * d, 0:1]                             # (5*d_c, 1)
    a_all = ps[0:5 * d, 1:2]
    bp = ps[0:C, 2:3]                                    # (C, 1)
    ap = ps[0:C, 3:4]

    # ---- fused f_qkv + t_qk 1x1 convs (BN folded) + PReLU, channel-major ----
    # 1/sqrt(d_c) is already folded into the q rows of w_all / b_all.
    y = jnp.dot(w_all, xm, preferred_element_type=jnp.float32) + b_all
    y = _prelu(y, a_all)                                 # (5*d_c, F*T)

    # Re-layout only the small d_c-wide conv output for the attention stages.
    y_ftc = jnp.transpose(y, (1, 0)).reshape(Fdim, Tdim, 5 * d)   # (F, T, 5*d_c)
    qt = y_ftc[:, :, 3 * d:4 * d]                        # (F, T, d_c)  (scaled)
    kt = y_ftc[:, :, 4 * d:5 * d]                        # (F, T, d_c)
    y_tfc = jnp.transpose(y_ftc[:, :, 0:3 * d], (1, 0, 2))        # (T, F, 3*d_c)
    qf = y_tfc[:, :, 0:d]                                # (T, F, d_c)  (scaled)
    kf = y_tfc[:, :, d:2 * d]
    v = y_tfc[:, :, 2 * d:3 * d]

    # ---- frequency attention: softmax over second freq axis, batched over T ----
    f_sc = jnp.einsum('tfc,tyc->tfy', qf, kf,
                      preferred_element_type=jnp.float32)          # (T, F, F)
    f_sc = f_sc - jnp.max(f_sc, axis=-1, keepdims=True)
    f_e = jnp.exp(f_sc)
    f_p = f_e * pl.reciprocal(jnp.sum(f_e, axis=-1, keepdims=True), approx=True)
    f_out_t = jnp.einsum('tfy,tyc->tfc', f_p, v,
                         preferred_element_type=jnp.float32)       # (T, F, d_c)

    # ---- time attention: causal softmax over second time axis, batched over F ----
    t_sc = jnp.einsum('ftc,fyc->fty', qt, kt,
                      preferred_element_type=jnp.float32)          # (F, T, T)
    if causal:
        row = lax.broadcasted_iota(jnp.int32, (Tdim, Tdim), 0)     # query t
        col = lax.broadcasted_iota(jnp.int32, (Tdim, Tdim), 1)     # key y
        neg = jnp.float32(-jnp.finfo(jnp.float32).max)             # max_neg_value
        t_sc = jnp.where((col > row)[None, :, :], neg, t_sc)
    t_sc = t_sc - jnp.max(t_sc, axis=-1, keepdims=True)
    t_e = jnp.exp(t_sc)
    t_p = t_e * pl.reciprocal(jnp.sum(t_e, axis=-1, keepdims=True), approx=True)

    # Cheapest possible inter-stage transpose: the d_c-wide f_out, not scores.
    f_out_f = jnp.transpose(f_out_t, (1, 0, 2))                    # (F, T, d_c)
    t_out = jnp.einsum('fty,fyc->ftc', t_p, f_out_f,
                       preferred_element_type=jnp.float32)         # (F, T, d_c)

    # ---- projection: 1x1 conv (BN folded) + PReLU + residual (lane-dense) ----
    t_cm = jnp.transpose(t_out.reshape(Fdim * Tdim, d), (1, 0))    # (d_c, F*T)
    po = jnp.dot(wp_ref[...], t_cm, preferred_element_type=jnp.float32) + bp
    po = _prelu(po, ap)                                            # (C, F*T)
    o_ref[0] = (po + xm).astype(o_ref.dtype)


def asa_forward_pallas(x_ncft, params, *, causal=True):
    """x_ncft: (B, C, F, T) float32 -> (B, C, F, T)"""
    B, C, Fdim, Tdim = x_ncft.shape
    d_c = params['wp'].shape[1]
    FT = Fdim * Tdim

    # Channel-major, lane-dense: no wrapper transposes, just a free reshape.
    x2d = x_ncft.reshape(B, C, FT)

    # Fuse f_qkv + t_qk weights; fold the 1/sqrt(d_c) score scale into the
    # q rows (exact: PReLU is positively homogeneous).
    w_all = jnp.concatenate([params['wf'], params['wt']], axis=0)   # (5*d_c, C)
    b_all = jnp.concatenate([params['bf'], params['bt']], axis=0)   # (5*d_c,)
    a_all = jnp.concatenate([params['af'], params['at']], axis=0)   # (5*d_c,)
    s = 1.0 / math.sqrt(d_c)
    scale = jnp.ones((5 * d_c,), jnp.float32)
    scale = scale.at[0:d_c].set(s).at[3 * d_c:4 * d_c].set(s)       # qf, qt rows
    w_all = w_all * scale[:, None]
    b_all = b_all * scale

    # One small parameter slab for all bias / PReLU-alpha column vectors.
    max_out = max(5 * d_c, C)

    def pad1(v):
        return jnp.pad(v, (0, max_out - v.shape[0]))

    pslab = jnp.stack([pad1(b_all), pad1(a_all),
                       pad1(params['bp']), pad1(params['ap'])], axis=1)  # (max_out, 4)

    kernel = partial(asa_kernel, d_c=d_c, Fdim=Fdim, Tdim=Tdim, causal=causal)

    out2d = pl.pallas_call(
        kernel,
        out_shape=jax.ShapeDtypeStruct((B, C, FT), jnp.float32),
        grid=(B,),
        in_specs=[
            pl.BlockSpec((1, C, FT), lambda b: (b, 0, 0)),
            pl.BlockSpec(w_all.shape, lambda b: (0, 0)),
            pl.BlockSpec(params['wp'].shape, lambda b: (0, 0)),
            pl.BlockSpec(pslab.shape, lambda b: (0, 0)),
        ],
        out_specs=pl.BlockSpec((1, C, FT), lambda b: (b, 0, 0)),
        compiler_params=pltpu.CompilerParams(
            dimension_semantics=("parallel",),          # batch is independent
            vmem_limit_bytes=48 * 1024 * 1024),
    )(x2d, w_all, params['wp'], pslab)

    return out2d.reshape(B, C, Fdim, Tdim)


# ---------------- deterministic parameter init (BN folded) ----------------
def _conv_bn_prelu_params(key, out_ch, in_ch):
    kw, kg, kb, km, kv, ka = jax.random.split(key, 6)
    w = 0.2 * jax.random.normal(kw, (out_ch, in_ch), jnp.float32)
    gamma = 1.0 + 0.1 * jax.random.normal(kg, (out_ch,), jnp.float32)
    beta = 0.1 * jax.random.normal(kb, (out_ch,), jnp.float32)
    run_mean = 0.1 * jax.random.normal(km, (out_ch,), jnp.float32)
    run_var = 0.5 + jax.random.uniform(kv, (out_ch,), jnp.float32)
    alpha = 0.25 + 0.05 * jax.random.normal(ka, (out_ch,), jnp.float32)  # PReLU
    eps = 1e-5
    sc = gamma / jnp.sqrt(run_var + eps)
    w_fold = w * sc[:, None]                     # (out, in), BN scale folded in
    b_fold = beta - run_mean * sc                # (out,)
    return w_fold, b_fold, alpha


def init_params(key, c):
    d_c = c // 4
    k1, k2, k3 = jax.random.split(key, 3)
    wf, bf, af = _conv_bn_prelu_params(k1, 3 * d_c, c)   # f_qkv
    wt, bt, at = _conv_bn_prelu_params(k2, 2 * d_c, c)   # t_qk
    wp, bp, ap = _conv_bn_prelu_params(k3, c, d_c)       # proj
    return dict(wf=wf, bf=bf, af=af, wt=wt, bt=bt, at=at, wp=wp, bp=bp, ap=ap)


# ---------------- pure-JAX reference (mirrors the PyTorch forward) ----------------
def asa_reference(x, params, causal=True):
    def cbp(z, w, b, a):
        y = jnp.einsum('oc,bcft->boft', w, z) + b[None, :, None, None]
        return jnp.where(y >= 0, y, a[None, :, None, None] * y)

    d_c = params['wp'].shape[1]
    yf = cbp(x, params['wf'], params['bf'], params['af'])
    qf, kf, v = yf[:, :d_c], yf[:, d_c:2 * d_c], yf[:, 2 * d_c:]
    fs = jnp.einsum('bcft,bcyt->btfy', qf, kf) / (d_c ** 0.5)
    fp = jax.nn.softmax(fs, axis=-1)
    f_out = jnp.einsum('btfy,bcyt->bcft', fp, v)

    yt = cbp(x, params['wt'], params['bt'], params['at'])
    qt, kt = yt[:, :d_c], yt[:, d_c:]
    ts = jnp.einsum('bcft,bcfy->bfty', qt, kt) / (d_c ** 0.5)
    if causal:
        T = ts.shape[-1]
        mask = jnp.triu(jnp.ones((T, T), dtype=bool), 1)
        ts = jnp.where(mask[None, None], -jnp.finfo(ts.dtype).max, ts)
    tp = jax.nn.softmax(ts, axis=-1)
    t_out = jnp.einsum('bfty,bcfy->bcft', tp, f_out)

    out = cbp(t_out, params['wp'], params['bp'], params['ap'])
    return out + x


if __name__ == "__main__":
    key = jax.random.PRNGKey(0)
    B, C, Fdim, Tdim = 2, 16, 8, 8            # c=16 -> d_c=4
    kx, kp = jax.random.split(key)
    x = jax.random.normal(kx, (B, C, Fdim, Tdim), jnp.float32)
    params = init_params(kp, C)

    out = asa_forward_pallas(x, params, causal=True)
    out = jax.block_until_ready(out)

    ref = asa_reference(x, params, causal=True)
    assert out.shape == x.shape
    max_err = float(jnp.max(jnp.abs(out - ref)))
    # Tolerance loosened vs pure-f32 agreement (2e-4) because the softmax
    # denominators now use the EUP approximate reciprocal (approx=True) per
    # the performance guidance; semantics/structure are unchanged.
    assert max_err < 5e-2, f"mismatch vs reference: {max_err}"
    print("KERNEL_OK")
</pallas_src>

<mosaic_0001>
module attributes {stable_mosaic.version = 11 : i64} {
  func.func @asa_kernel(%arg0: i32, %arg1: memref<1x16x64xf32, #tpu.memory_space<vmem>>, %arg2: memref<20x16xf32, #tpu.memory_space<vmem>>, %arg3: memref<16x4xf32, #tpu.memory_space<vmem>>, %arg4: memref<20x4xf32, #tpu.memory_space<vmem>>, %arg5: memref<1x16x64xf32, #tpu.memory_space<vmem>>) attributes {dimension_semantics = [#tpu.dimension_semantics<parallel>], iteration_bounds = array<i64: 2>, scalar_prefetch = 0 : i64, scratch_operands = 0 : i64, tpu.core_type = #tpu.core_type<tc>, window_params = [{transform_indices = @transform_0, window_bounds = array<i64: 1, 16, 64>}, {pipeline_mode = #tpu.pipeline_mode<synchronous>, transform_indices = @transform_1, window_bounds = array<i64: 20, 16>}, {pipeline_mode = #tpu.pipeline_mode<synchronous>, transform_indices = @transform_2, window_bounds = array<i64: 16, 4>}, {pipeline_mode = #tpu.pipeline_mode<synchronous>, transform_indices = @transform_3, window_bounds = array<i64: 20, 4>}, {transform_indices = @transform_4, window_bounds = array<i64: 1, 16, 64>}]} {
    %c0 = arith.constant 0 : index
    %c0_0 = arith.constant 0 : index
    %c0_1 = arith.constant 0 : index
    %0 = vector.load %arg1[%c0, %c0_0, %c0_1] : memref<1x16x64xf32, #tpu.memory_space<vmem>>, vector<1x16x64xf32>
    %1 = vector.shape_cast %0 : vector<1x16x64xf32> to vector<16x64xf32>
    %c0_2 = arith.constant 0 : index
    %c0_3 = arith.constant 0 : index
    %2 = vector.load %arg2[%c0_2, %c0_3] : memref<20x16xf32, #tpu.memory_space<vmem>>, vector<20x16xf32>
    %c0_4 = arith.constant 0 : index
    %c0_5 = arith.constant 0 : index
    %3 = vector.load %arg4[%c0_4, %c0_5] : memref<20x4xf32, #tpu.memory_space<vmem>>, vector<20x4xf32>
    %4 = vector.extract_strided_slice %3 {offsets = [0, 0], sizes = [20, 1], strides = [1, 1]} : vector<20x4xf32> to vector<20x1xf32>
    %5 = vector.extract_strided_slice %3 {offsets = [0, 1], sizes = [20, 1], strides = [1, 1]} : vector<20x4xf32> to vector<20x1xf32>
    %6 = vector.extract_strided_slice %3 {offsets = [0, 2], sizes = [16, 1], strides = [1, 1]} : vector<20x4xf32> to vector<16x1xf32>
    %7 = vector.extract_strided_slice %3 {offsets = [0, 3], sizes = [16, 1], strides = [1, 1]} : vector<20x4xf32> to vector<16x1xf32>
    %cst = arith.constant dense<0.000000e+00> : vector<20x64xf32>
    %8 = tpu.matmul %2, %1, %cst {dimension_numbers = #tpu.dot_dimension_numbers<[1], [0], [0], [1], [0, 0, 1, 1], [], []>} : vector<20x16xf32>, vector<16x64xf32>, vector<20x64xf32> -> vector<20x64xf32>
    %9 = vector.broadcast %4 : vector<20x1xf32> to vector<20x64xf32>
    %10 = arith.addf %8, %9 : vector<20x64xf32>
    %cst_6 = arith.constant 0.000000e+00 : f32
    %11 = vector.broadcast %cst_6 : f32 to vector<20x64xf32>
    %12 = arith.cmpf oge, %10, %11 : vector<20x64xf32>
    %13 = vector.broadcast %5 : vector<20x1xf32> to vector<20x64xf32>
    %14 = arith.mulf %13, %10 : vector<20x64xf32>
    %15 = arith.select %12, %10, %14 : vector<20x64xi1>, vector<20x64xf32>
    %16 = tpu.transpose %15, [1, 0] : vector<20x64xf32> -> vector<64x20xf32>
    %17 = vector.shape_cast %16 : vector<64x20xf32> to vector<8x8x20xf32>
    %18 = vector.extract_strided_slice %17 {offsets = [0, 0, 12], sizes = [8, 8, 4], strides = [1, 1, 1]} : vector<8x8x20xf32> to vector<8x8x4xf32>
    %19 = vector.extract_strided_slice %17 {offsets = [0, 0, 16], sizes = [8, 8, 4], strides = [1, 1, 1]} : vector<8x8x20xf32> to vector<8x8x4xf32>
    %20 = vector.extract_strided_slice %17 {offsets = [0, 0, 0], sizes = [8, 8, 12], strides = [1, 1, 1]} : vector<8x8x20xf32> to vector<8x8x12xf32>
    %21 = tpu.transpose %20, [1, 0, 2] : vector<8x8x12xf32> -> vector<8x8x12xf32>
    %22 = vector.extract_strided_slice %21 {offsets = [0, 0, 0], sizes = [8, 8, 4], strides = [1, 1, 1]} : vector<8x8x12xf32> to vector<8x8x4xf32>
    %23 = vector.extract_strided_slice %21 {offsets = [0, 0, 4], sizes = [8, 8, 4], strides = [1, 1, 1]} : vector<8x8x12xf32> to vector<8x8x4xf32>
    %24 = vector.extract_strided_slice %21 {offsets = [0, 0, 8], sizes = [8, 8, 4], strides = [1, 1, 1]} : vector<8x8x12xf32> to vector<8x8x4xf32>
    "tpu.trace_start"() <{level = 10 : i32, message = "tfc,tyc->tfy"}> : () -> ()
    %cst_7 = arith.constant dense<0.000000e+00> : vector<8x8x8xf32>
    %25 = tpu.matmul %22, %23, %cst_7 {dimension_numbers = #tpu.dot_dimension_numbers<[2], [2], [1], [1], [0, 0, 0, 1, 1, 1], [0], [0]>} : vector<8x8x4xf32>, vector<8x8x4xf32>, vector<8x8x8xf32> -> vector<8x8x8xf32>
    "tpu.trace_stop"() : () -> ()
    %cst_8 = arith.constant dense<0xFF800000> : vector<8x8xf32>
    %26 = vector.multi_reduction <maximumf>, %25, %cst_8 [2] : vector<8x8x8xf32> to vector<8x8xf32>
    %27 = vector.shape_cast %26 : vector<8x8xf32> to vector<8x8x1xf32>
    %28 = vector.broadcast %27 : vector<8x8x1xf32> to vector<8x8x8xf32>
    %29 = arith.subf %25, %28 : vector<8x8x8xf32>
    %30 = math.exp %29 : vector<8x8x8xf32>
    %cst_9 = arith.constant dense<0.000000e+00> : vector<8x8xf32>
    %31 = vector.multi_reduction <add>, %30, %cst_9 [2] : vector<8x8x8xf32> to vector<8x8xf32>
    %32 = vector.shape_cast %31 : vector<8x8xf32> to vector<8x8x1xf32>
    %33 = tpu.reciprocal %32 {approx = true} : vector<8x8x1xf32> -> vector<8x8x1xf32>
    %34 = vector.broadcast %33 : vector<8x8x1xf32> to vector<8x8x8xf32>
    %35 = arith.mulf %30, %34 : vector<8x8x8xf32>
    "tpu.trace_start"() <{level = 10 : i32, message = "tfy,tyc->tfc"}> : () -> ()
    %cst_10 = arith.constant dense<0.000000e+00> : vector<8x8x4xf32>
    %36 = tpu.matmul %35, %24, %cst_10 {dimension_numbers = #tpu.dot_dimension_numbers<[2], [1], [1], [2], [0, 0, 0, 1, 1, 2], [0], [0]>} : vector<8x8x8xf32>, vector<8x8x4xf32>, vector<8x8x4xf32> -> vector<8x8x4xf32>
    "tpu.trace_stop"() : () -> ()
    "tpu.trace_start"() <{level = 10 : i32, message = "ftc,fyc->fty"}> : () -> ()
    %cst_11 = arith.constant dense<0.000000e+00> : vector<8x8x8xf32>
    %37 = tpu.matmul %18, %19, %cst_11 {dimension_numbers = #tpu.dot_dimension_numbers<[2], [2], [1], [1], [0, 0, 0, 1, 1, 1], [0], [0]>} : vector<8x8x4xf32>, vector<8x8x4xf32>, vector<8x8x8xf32> -> vector<8x8x8xf32>
    "tpu.trace_stop"() : () -> ()
    %38 = tpu.iota {dimensions = array<i32: 0>} : vector<8x8xi32>
    %39 = tpu.iota {dimensions = array<i32: 1>} : vector<8x8xi32>
    %40 = arith.cmpi sgt, %39, %38 : vector<8x8xi32>
    %41 = vector.shape_cast %40 : vector<8x8xi1> to vector<1x8x8xi1>
    %cst_12 = arith.constant -3.40282347E+38 : f32
    %42 = vector.shape_cast %41 : vector<1x8x8xi1> to vector<1x8x8xi1>
    %43 = vector.broadcast %42 : vector<1x8x8xi1> to vector<8x8x8xi1>
    %44 = vector.broadcast %cst_12 : f32 to vector<8x8x8xf32>
    %45 = arith.select %43, %44, %37 : vector<8x8x8xi1>, vector<8x8x8xf32>
    %cst_13 = arith.constant dense<0xFF800000> : vector<8x8xf32>
    %46 = vector.multi_reduction <maximumf>, %45, %cst_13 [2] : vector<8x8x8xf32> to vector<8x8xf32>
    %47 = vector.shape_cast %46 : vector<8x8xf32> to vector<8x8x1xf32>
    %48 = vector.broadcast %47 : vector<8x8x1xf32> to vector<8x8x8xf32>
    %49 = arith.subf %45, %48 : vector<8x8x8xf32>
    %50 = math.exp %49 : vector<8x8x8xf32>
    %cst_14 = arith.constant dense<0.000000e+00> : vector<8x8xf32>
    %51 = vector.multi_reduction <add>, %50, %cst_14 [2] : vector<8x8x8xf32> to vector<8x8xf32>
    %52 = vector.shape_cast %51 : vector<8x8xf32> to vector<8x8x1xf32>
    %53 = tpu.reciprocal %52 {approx = true} : vector<8x8x1xf32> -> vector<8x8x1xf32>
    %54 = vector.broadcast %53 : vector<8x8x1xf32> to vector<8x8x8xf32>
    %55 = arith.mulf %50, %54 : vector<8x8x8xf32>
    %56 = tpu.transpose %36, [1, 0, 2] : vector<8x8x4xf32> -> vector<8x8x4xf32>
    "tpu.trace_start"() <{level = 10 : i32, message = "fty,fyc->ftc"}> : () -> ()
    %cst_15 = arith.constant dense<0.000000e+00> : vector<8x8x4xf32>
    %57 = tpu.matmul %55, %56, %cst_15 {dimension_numbers = #tpu.dot_dimension_numbers<[2], [1], [1], [2], [0, 0, 0, 1, 1, 2], [0], [0]>} : vector<8x8x8xf32>, vector<8x8x4xf32>, vector<8x8x4xf32> -> vector<8x8x4xf32>
    "tpu.trace_stop"() : () -> ()
    %58 = vector.shape_cast %57 : vector<8x8x4xf32> to vector<64x4xf32>
    %59 = tpu.transpose %58, [1, 0] : vector<64x4xf32> -> vector<4x64xf32>
    %c0_16 = arith.constant 0 : index
    %c0_17 = arith.constant 0 : index
    %60 = vector.load %arg3[%c0_16, %c0_17] : memref<16x4xf32, #tpu.memory_space<vmem>>, vector<16x4xf32>
    %cst_18 = arith.constant dense<0.000000e+00> : vector<16x64xf32>
    %61 = tpu.matmul %60, %59, %cst_18 {dimension_numbers = #tpu.dot_dimension_numbers<[1], [0], [0], [1], [0, 0, 1, 1], [], []>} : vector<16x4xf32>, vector<4x64xf32>, vector<16x64xf32> -> vector<16x64xf32>
    %62 = vector.broadcast %6 : vector<16x1xf32> to vector<16x64xf32>
    %63 = arith.addf %61, %62 : vector<16x64xf32>
    %cst_19 = arith.constant 0.000000e+00 : f32
    %64 = vector.broadcast %cst_19 : f32 to vector<16x64xf32>
    %65 = arith.cmpf oge, %63, %64 : vector<16x64xf32>
    %66 = vector.broadcast %7 : vector<16x1xf32> to vector<16x64xf32>
    %67 = arith.mulf %66, %63 : vector<16x64xf32>
    %68 = arith.select %65, %63, %67 : vector<16x64xi1>, vector<16x64xf32>
    %69 = arith.addf %68, %1 : vector<16x64xf32>
    %c0_20 = arith.constant 0 : index
    %c0_21 = arith.constant 0 : index
    %c0_22 = arith.constant 0 : index
    %70 = vector.load %arg5[%c0_20, %c0_21, %c0_22] : memref<1x16x64xf32, #tpu.memory_space<vmem>>, vector<1x16x64xf32>
    %71 = vector.shape_cast %70 : vector<1x16x64xf32> to vector<16x64xf32>
    %72 = vector.shape_cast %69 : vector<16x64xf32> to vector<1x16x64xf32>
    tpu.vector_store %arg5[%c0_20, %c0_21, %c0_22], %72 {strides = array<i32>} : memref<1x16x64xf32, #tpu.memory_space<vmem>>, vector<1x16x64xf32>,
    return
  }
  func.func @transform_0(%arg0: i32) -> (i32, i32, i32) {
    %c0_i32 = arith.constant 0 : i32
    %c0_i32_0 = arith.constant 0 : i32
    %c0_i32_1 = arith.constant 0 : i32
    return %arg0, %c0_i32, %c0_i32_0 : i32, i32, i32
  }
  func.func @transform_1(%arg0: i32) -> (i32, i32) {
    %c0_i32 = arith.constant 0 : i32
    %c0_i32_0 = arith.constant 0 : i32
    %c0_i32_1 = arith.constant 0 : i32
    return %c0_i32, %c0_i32_0 : i32, i32
  }
  func.func @transform_2(%arg0: i32) -> (i32, i32) {
    %c0_i32 = arith.constant 0 : i32
    %c0_i32_0 = arith.constant 0 : i32
    %c0_i32_1 = arith.constant 0 : i32
    return %c0_i32, %c0_i32_0 : i32, i32
  }
  func.func @transform_3(%arg0: i32) -> (i32, i32) {
    %c0_i32 = arith.constant 0 : i32
    %c0_i32_0 = arith.constant 0 : i32
    %c0_i32_1 = arith.constant 0 : i32
    return %c0_i32, %c0_i32_0 : i32, i32
  }
  func.func @transform_4(%arg0: i32) -> (i32, i32, i32) {
    %c0_i32 = arith.constant 0 : i32
    %c0_i32_0 = arith.constant 0 : i32
    %c0_i32_1 = arith.constant 0 : i32
    return %arg0, %c0_i32, %c0_i32_0 : i32, i32, i32
  }
}

</mosaic_0001>

<llo_original>
// kernel: tpu_custom_call.1
$region0: #{tpu_custom_call.1}
  #allocation0 [shape = 'u32[]', space=smem, size = 0x4, offset = 0x4, fixed_abs, tag = 'smem constant byte address 0x4 - core index']
  #allocation1 [shape = 'u32[72,128]{1,0:T(1,128)}', space=vmem, size = 0x9000, scoped, tag = 'internal scratch']
  %s0 = inlined_call_operand.vmem [shape: f32[2,16,64], index: 0, kind: input, shape index: {}]
  %s1 = inlined_call_operand.vmem [shape: f32[20,16], index: 1, kind: input, shape index: {}]
  %s2 = inlined_call_operand.vmem [shape: f32[16,4], index: 2, kind: input, shape index: {}]
  %s3 = inlined_call_operand.vmem [shape: f32[20,4], index: 3, kind: input, shape index: {}]
  %s4 = inlined_call_operand.hbm [shape: f32[2,16,64], index: 4, kind: output, shape index: {}]
  %s5 = sld [smem:[#allocation0]]
  $region49: #{tpu_custom_call.1} parent=0
    _
  %s7 = ssub.s32 1, %s5
  %s8 = scalar_select 0, %s7, %s5
  $region1: #{tpu_custom_call.1} parent=0
    #allocation2 [shape = 'u8[16384]{0}', space=vmem, size = 0x4000, scoped, tag = 'output window, operand 0']
    #allocation3 [shape = 's32[2]{0}', space=sflag, size = 0x8, scoped, tag = 'scoped memory for tpu_custom_call.1']
    %9 = vsyncpa [#allocation3], 0
    %s10 = scalar_lea.sflag [#allocation3], 1
    %11 = vsyncpa %s10, 0
    loop: start=0, step=1, limit=4
    $region2: #{tpu_custom_call.1} parent=1 // loop_pre_header
      _
    $region3: #{tpu_custom_call.1} parent=1 // loop_header
      %s13 = sphi 0, %s17
      %p14 = scmp.ge.s32.totalorder %s13, 4
      %s23 = sphi 0, %s25
      %s26 = sphi 0, %s23
      %s27 = sphi 0, %s26
      %s43 = sphi 0, %s27
      %s47 = sphi 0, %s47
      %s49 = sphi 0, %s47
      %s50 = sphi 0, %s49
      %s64 = sphi 0, %s50
      %s68 = sphi 0, %s68
      %s70 = sphi 0, %s68
      %s71 = sphi 0, %s70
      %s85 = sphi 0, %s71
      %s89 = sphi 0, %s89
      %s91 = sphi 0, %s89
      %s92 = sphi 0, %s91
      %s106 = sphi 0, %s92
      %s112 = sphi 0, %s114
      %s115 = sphi 0, %s112
      %s116 = sphi 0, %s115
      %s132 = sphi 0, %s116
    $region4: #{tpu_custom_call.1} parent=1 // loop_header_branch
      %16 = sbr.rel (%p14) target = $region8
    $region5: #{tpu_custom_call.1} parent=1 // loop_body
      %s18 = ssub.s32 %s13, 1
      %s19 = ssub.s32 %s13, 2
      %s20 = sadd.s32 %s13, 1
      %s21 = ssub.s32 %s13, %s20
      %p22 = scmp.eq.s32.totalorder %s21, 0
      %s24 = sadd.s32 %s23, 1
      %s25 = scalar_select %p22, %s23, %s24
      %p28 = pneg %p22
      %p29 = scmp.eq.s32.totalorder %s13, 1
      %p30 = por %p28, %p29
      %p31 = scmp.ne.s32.totalorder %s23, %s26
      %p32 = scmp.eq.s32.totalorder %s13, 0
      %p33 = por %p31, %p32
      %p34 = scmp.ne.s32.totalorder %s23, %s26
      %p35 = scmp.eq.s32.totalorder %s18, 1
      %p36 = por %p34, %p35
      %p37 = scmp.ne.s32.totalorder %s26, %s27
      %p38 = scmp.eq.s32.totalorder %s18, 0
      %p39 = por %p37, %p38
      %p40 = scmp.ne.s32.totalorder %s26, %s27
      %p41 = scmp.eq.s32.totalorder %s19, 1
      %p42 = por %p40, %p41
      %p44 = scmp.ne.s32.totalorder %s27, %s43
      %p45 = scmp.eq.s32.totalorder %s19, 0
      %p46 = por %p44, %p45
      %s48 = sadd.s32 %s47, 1
      %p51 = scmp.eq.s32.totalorder %s13, 1
      %p52 = scmp.ne.s32.totalorder %s47, %s49
      %p53 = scmp.eq.s32.totalorder %s13, 0
      %p54 = por %p52, %p53
      %p55 = scmp.ne.s32.totalorder %s47, %s49
      %p56 = scmp.eq.s32.totalorder %s18, 1
      %p57 = por %p55, %p56
      %p58 = scmp.ne.s32.totalorder %s49, %s50
      %p59 = scmp.eq.s32.totalorder %s18, 0
      %p60 = por %p58, %p59
      %p61 = scmp.ne.s32.totalorder %s49, %s50
      %p62 = scmp.eq.s32.totalorder %s19, 1
      %p63 = por %p61, %p62
      %p65 = scmp.ne.s32.totalorder %s50, %s64
      %p66 = scmp.eq.s32.totalorder %s19, 0
      %p67 = por %p65, %p66
      %s69 = sadd.s32 %s68, 1
      %p72 = scmp.eq.s32.totalorder %s13, 1
      %p73 = scmp.ne.s32.totalorder %s68, %s70
      %p74 = scmp.eq.s32.totalorder %s13, 0
      %p75 = por %p73, %p74
      %p76 = scmp.ne.s32.totalorder %s68, %s70
      %p77 = scmp.eq.s32.totalorder %s18, 1
      %p78 = por %p76, %p77
      %p79 = scmp.ne.s32.totalorder %s70, %s71
      %p80 = scmp.eq.s32.totalorder %s18, 0
      %p81 = por %p79, %p80
      %p82 = scmp.ne.s32.totalorder %s70, %s71
      %p83 = scmp.eq.s32.totalorder %s19, 1
      %p84 = por %p82, %p83
      %p86 = scmp.ne.s32.totalorder %s71, %s85
      %p87 = scmp.eq.s32.totalorder %s19, 0
      %p88 = por %p86, %p87
      %s90 = sadd.s32 %s89, 1
      %p93 = scmp.eq.s32.totalorder %s13, 1
      %p94 = scmp.ne.s32.totalorder %s89, %s91
      %p95 = scmp.eq.s32.totalorder %s13, 0
      %p96 = por %p94, %p95
      %p97 = scmp.ne.s32.totalorder %s89, %s91
      %p98 = scmp.eq.s32.totalorder %s18, 1
      %p99 = por %p97, %p98
      %p100 = scmp.ne.s32.totalorder %s91, %s92
      %p101 = scmp.eq.s32.totalorder %s18, 0
      %p102 = por %p100, %p101
      %p103 = scmp.ne.s32.totalorder %s91, %s92
      %p104 = scmp.eq.s32.totalorder %s19, 1
      %p105 = por %p103, %p104
      %p107 = scmp.ne.s32.totalorder %s92, %s106
      %p108 = scmp.eq.s32.totalorder %s19, 0
      %p109 = por %p107, %p108
      %s110 = ssub.s32 %s13, %s20
      %p111 = scmp.eq.s32.totalorder %s110, 0
      %s113 = sadd.s32 %s112, 1
      %s114 = scalar_select %p111, %s112, %s113
      %p117 = pneg %p111
      %p118 = scmp.eq.s32.totalorder %s13, 1
      %p119 = por %p117, %p118
      %p120 = scmp.ne.s32.totalorder %s112, %s115
      %p121 = scmp.eq.s32.totalorder %s13, 0
      %p122 = por %p120, %p121
      %p123 = scmp.ne.s32.totalorder %s112, %s115
      %p124 = scmp.eq.s32.totalorder %s18, 1
      %p125 = por %p123, %p124
      %p126 = scmp.ne.s32.totalorder %s115, %s116
      %p127 = scmp.eq.s32.totalorder %s18, 0
      %p128 = por %p126, %p127
      %p129 = scmp.ne.s32.totalorder %s115, %s116
      %p130 = scmp.eq.s32.totalorder %s19, 1
      %p131 = por %p129, %p130
      %p133 = scmp.ne.s32.totalorder %s116, %s132
      %p134 = scmp.eq.s32.totalorder %s19, 0
      %p135 = por %p133, %p134
      %p136 = scmp.le.s32.totalorder 1, %s13
      %p137 = scmp.lt.s32.totalorder %s13, 3
      %p138 = pnand %p136, %p137
      %p139 = pneg %p138
      // Predicated region
      $region9: #{tpu_custom_call.1} parent=5 // pred_check
        _
      $region10: #{tpu_custom_call.1} parent=5 // pred_check_branch
        %141 = sbr.rel (%p138) target = $region12
      $region11: #{tpu_custom_call.1} parent=5 // pred_region
        %s142 = ssub.s32 %s13, 1
        // Predicated region
        $region13: #{tpu_custom_call.1} parent=11 // pred_check
          %p143 = pneg %p60
        $region14: #{tpu_custom_call.1} parent=11 // pred_check_branch
          %145 = sbr.rel (%p143) target = $region16
        $region15: #{tpu_custom_call.1} parent=11 // pred_region
          _
        $region16: #{tpu_custom_call.1} parent=11 // pred_fallthru
          _
        // Predicated region
        $region17: #{tpu_custom_call.1} parent=11 // pred_check
          %p146 = pneg %p81
        $region18: #{tpu_custom_call.1} parent=11 // pred_check_branch
          %148 = sbr.rel (%p146) target = $region20
        $region19: #{tpu_custom_call.1} parent=11 // pred_region
          _
        $region20: #{tpu_custom_call.1} parent=11 // pred_fallthru
          _
        // Predicated region
        $region21: #{tpu_custom_call.1} parent=11 // pred_check
          %p149 = pneg %p102
        $region22: #{tpu_custom_call.1} parent=11 // pred_check_branch
          %151 = sbr.rel (%p149) target = $region24
        $region23: #{tpu_custom_call.1} parent=11 // pred_region
          _
        $region24: #{tpu_custom_call.1} parent=11 // pred_fallthru
          _
      $region12: #{tpu_custom_call.1} parent=5 // pred_fallthru
        _
      %p152 = scmp.lt.s32.totalorder %s13, 2
      // Predicated region
      $region25: #{tpu_custom_call.1} parent=5 // pred_check
        %p153 = pneg %p152
      $region26: #{tpu_custom_call.1} parent=5 // pred_check_branch
        %155 = sbr.rel (%p153) target = $region28
      $region27: #{tpu_custom_call.1} parent=5 // pred_region
        // Predicated region
        $region29: #{tpu_custom_call.1} parent=27 // pred_check
          %p156 = pneg %p33
        $region30: #{tpu_custom_call.1} parent=27 // pred_check_branch
          %158 = sbr.rel (%p156) target = $region32
        $region31: #{tpu_custom_call.1} parent=27 // pred_region
          %p159 = scmp.lt.s32.totalorder %s13, 1
          %s160 = scalar_select %p159, %s13, 1
          %s161 = smul.addr %s160, 2
          %s162 = smul.addr %s161, 8
          %s163 = scalar_lea.vmem %s0, %s162
        $region32: #{tpu_custom_call.1} parent=27 // pred_fallthru
          _
      $region28: #{tpu_custom_call.1} parent=5 // pred_fallthru
        _
      %p164 = scmp.le.s32.totalorder 1, %s13
      %p165 = scmp.lt.s32.totalorder %s13, 3
      %p166 = pnand %p164, %p165
      %p167 = pneg %p166
      // Predicated region
      $region33: #{tpu_custom_call.1} parent=5 // pred_check
        _
      $region34: #{tpu_custom_call.1} parent=5 // pred_check_branch
        %169 = sbr.rel (%p166) target = $region36
      $region35: #{tpu_custom_call.1} parent=5 // pred_region
        %s170 = ssub.s32 %s13, 1
        %p171 = scmp.lt.s32.totalorder %s18, 1
        %s172 = scalar_select %p171, %s18, 1
        %s173 = smul.addr %s172, 2
        %s174 = smul.addr %s173, 8
        %s175 = scalar_lea.vmem %s0, %s174
        %p176 = pneg %p39
        %p177 = pneg %p36
        %p178 = pneg %p60
        %p179 = pneg %p57
        %p180 = pneg %p81
        %p181 = pneg %p78
        %p182 = pneg %p102
        %p183 = pneg %p99
        %p184 = pneg %p128
        %p185 = pneg %p125
        %s186 = sand.u32 %s115, 1
        %s187 = scalar_lea.sflag [#allocation3], %s186
        %s188 = sand.u32 %s115, 1
        %s189 = smul.addr %s188, 16
        %s190 = scalar_lea.vmem [#allocation2], %s189
        %p191 = scmp.lt.s32.totalorder %s18, 1
        %s192 = scalar_select %p191, %s18, 1
        %s193 = smul.addr %s192, 2
        %s194 = smul.addr %s193, 8
        %s195 = scalar_lea.vmem %s0, %s194
        %v196 = vld [vmem:[%s195] sm:$0xff]
        %v197 = vld [vmem:[%s195 + $0x8] sm:$0xff]
        %v198 = vld [vmem:[%s1] sm:$0xff]
        %v199 = vld [vmem:[%s1 + $0x8] sm:$0xff]
        %v200 = vld [vmem:[%s1 + $0x10] sm:$0xf]
        %v201 = vld [vmem:[%s3] sm:$0xff]
        %v202 = vld [vmem:[%s3 + $0x8] sm:$0xff]
        %v203 = vld [vmem:[%s3 + $0x10] sm:$0xf]
        %205 = vset.pattern.permute.xlu0 0
        %206 = vperm.xlu0 %205, %v201
        %v207 = vpop.permute.xlu0 %206
        %210 = vset.pattern.permute.xlu0 0
        %211 = vperm.xlu0 %210, %v202
        %v212 = vpop.permute.xlu0 %211
        %215 = vset.pattern.permute.xlu0 0
        %216 = vperm.xlu0 %215, %v203
        %v217 = vpop.permute.xlu0 %216
        %vm219 = vcmask 130048
        %v221 = vsel %vm219, %v198, 0
        %v224 = vsel %vm219, %v199, 0
        %v227 = vsel %vm219, %v200, 0
        %229 = vmatpush.msra.mxu0 0.0
        %230 = vmatpush.msra.mxu0 0.0
        %231 = vmatpush.msra.mxu0 0.0
        %232 = vmatpush.msra.mxu0 0.0
        %233 = vmatpush.msra.mxu0 0.0
        %234 = vmatpush.msra.mxu0 0.0
        %235 = vmatpush.msra.mxu0 0.0
        %236 = vmatpush.msra.mxu0 0.0
        %237 = vmatpush.msra.mxu0 0.0
        %238 = vmatpush.msra.mxu0 0.0
        %239 = vmatpush.msra.mxu0 0.0
        %240 = vmatpush.msra.mxu0 0.0
        %241 = vmatpush.msra.mxu0 0.0
        %242 = vmatpush.msra.mxu0 0.0
        %243 = vmatpush.msra.mxu0 %v197
        %244 = vmatpush.msra.mxu0 %v196
        %245 = vmatmul.f32.gmra.mxu0 %v221
        %v246 = vpop.f32.mrf.mxu0
        %v247 = vadd.f32 %v207, %v246
        %248 = vmatmul.f32.gmra.mxu0 %v224
        %v249 = vpop.f32.mrf.mxu0
        %v250 = vadd.f32 %v212, %v249
        %251 = vmatmul.f32.gmra.mxu0 %v227
        %v252 = vpop.f32.mrf.mxu0
        %v253 = vadd.f32 %v217, %v252
        %254 = vdwg.mxu0
        %vm255 = vcmp.ge.f32.partialorder %v247, 0.0
        %vm256 = vcmp.ge.f32.partialorder %v250, 0.0
        %vm257 = vcmp.ge.f32.partialorder %v253, 0.0
        %258 = vset.pattern.permute.xlu0 1
        %259 = vperm.xlu0 %258, %v201
        %v260 = vpop.permute.xlu0 %259
        %262 = vset.pattern.permute.xlu0 1
        %263 = vperm.xlu0 %262, %v202
        %v264 = vpop.permute.xlu0 %263
        %266 = vset.pattern.permute.xlu0 1
        %267 = vperm.xlu0 %266, %v203
        %v268 = vpop.permute.xlu0 %267
        %v270 = vmul.f32 %v260, %v247
        %v271 = vmul.f32 %v264, %v250
        %v272 = vmul.f32 %v268, %v253
        %v273 = vsel %vm255, %v247, %v270
        %v274 = vsel %vm256, %v250, %v271
        %v275 = vsel %vm257, %v253, %v272
        %276 = vxpose.xlu0.b32.start [1/16] %v273, 128
        %277 = vxpose.xlu0.b32.cont [2/16] %v274, 128
        %278 = vxpose.xlu0.b32.cont [3/16] %v275, 128
        %279 = vxpose.xlu0.b32.cont [4/16] 0.0, 128
        %280 = vxpose.xlu0.b32.cont [5/16] 0.0, 128
        %281 = vxpose.xlu0.b32.cont [6/16] 0.0, 128
        %282 = vxpose.xlu0.b32.cont [7/16] 0.0, 128
        %283 = vxpose.xlu0.b32.cont [8/16] 0.0, 128
        %284 = vxpose.xlu0.b32.cont [9/16] 0.0, 128
        %285 = vxpose.xlu0.b32.cont [10/16] 0.0, 128
        %286 = vxpose.xlu0.b32.cont [11/16] 0.0, 128
        %287 = vxpose.xlu0.b32.cont [12/16] 0.0, 128
        %288 = vxpose.xlu0.b32.cont [13/16] 0.0, 128
        %289 = vxpose.xlu0.b32.cont [14/16] 0.0, 128
        %290 = vxpose.xlu0.b32.cont [15/16] 0.0, 128
        %291 = vxpose.xlu0.b32.end [16/16] 0.0, 128
        %v292 = vpop.trf.xlu0
        %v293 = vpop.trf.xlu0
        %v294 = vpop.trf.xlu0
        %v295 = vpop.trf.xlu0
        %v296 = vpop.trf.xlu0
        %v297 = vpop.trf.xlu0
        %v298 = vpop.trf.xlu0
        %v299 = vpop.trf.xlu0
        %v300 = vpop.trf.xlu0
        %v301 = vpop.trf.xlu0
        %v302 = vpop.trf.xlu0
        %v303 = vpop.trf.xlu0
        %v304 = vpop.trf.xlu0
        %v305 = vpop.trf.xlu0
        %v306 = vpop.trf.xlu0
        %v307 = vpop.trf.xlu0
        %v308 = vrot.slane %v294, 4
        %vm309 = vcmask 1047556
        %v310 = vsel %vm309, %v308, %v292
        %v311 = vrot.slane %v292, 4
        %v312 = vsel %vm309, %v294, %v311
        %v314 = vunpack.c.l.s4 1983009808
        %v315 = vunpack.c.0.s8 %v314
        %v316 = vperm.slane %v310, %v315
        %v318 = vunpack.c.l.s4 1983009808
        %v319 = vunpack.c.0.s8 %v318
        %v320 = vperm.slane %v312, %v319
        %v321 = vrot.slane %v295, 4
        %v322 = vsel %vm309, %v321, %v293
        %v323 = vrot.slane %v293, 4
        %v324 = vsel %vm309, %v295, %v323
        %v326 = vunpack.c.l.s4 1983009808
        %v327 = vunpack.c.0.s8 %v326
        %v328 = vperm.slane %v322, %v327
        %v330 = vunpack.c.l.s4 1983009808
        %v331 = vunpack.c.0.s8 %v330
        %v332 = vperm.slane %v324, %v331
        %v333 = vrot.slane %v298, 4
        %v334 = vsel %vm309, %v333, %v296
        %v335 = vrot.slane %v296, 4
        %v336 = vsel %vm309, %v298, %v335
        %v338 = vunpack.c.l.s4 1983009808
        %v339 = vunpack.c.0.s8 %v338
        %v340 = vperm.slane %v334, %v339
        %v342 = vunpack.c.l.s4 1983009808
        %v343 = vunpack.c.0.s8 %v342
        %v344 = vperm.slane %v336, %v343
        %v345 = vrot.slane %v299, 4
        %v346 = vsel %vm309, %v345, %v297
        %v347 = vrot.slane %v297, 4
        %v348 = vsel %vm309, %v299, %v347
        %v350 = vunpack.c.l.s4 1983009808
        %v351 = vunpack.c.0.s8 %v350
        %v352 = vperm.slane %v346, %v351
        %v354 = vunpack.c.l.s4 1983009808
        %v355 = vunpack.c.0.s8 %v354
        %v356 = vperm.slane %v348, %v355
        %v357 = vrot.slane %v328, 4
        %v358 = vsel %vm309, %v357, %v316
        %v359 = vrot.slane %v316, 4
        %v360 = vsel %vm309, %v328, %v359
        %v362 = vunpack.c.l.s4 1934713408
        %v363 = vunpack.c.0.s8 %v362
        %v364 = vperm.slane %v358, %v363
        %v366 = vunpack.c.l.s4 1934713408
        %v367 = vunpack.c.0.s8 %v366
        %v368 = vperm.slane %v360, %v367
        %v369 = vrot.slane %v332, 4
        %v370 = vsel %vm309, %v369, %v320
        %v371 = vrot.slane %v320, 4
        %v372 = vsel %vm309, %v332, %v371
        %v374 = vunpack.c.l.s4 1934713408
        %v375 = vunpack.c.0.s8 %v374
        %v376 = vperm.slane %v370, %v375
        %v378 = vunpack.c.l.s4 1934713408
        %v379 = vunpack.c.0.s8 %v378
        %v380 = vperm.slane %v372, %v379
        %v381 = vrot.slane %v352, 4
        %v382 = vsel %vm309, %v381, %v340
        %v383 = vrot.slane %v340, 4
        %v384 = vsel %vm309, %v352, %v383
        %v386 = vunpack.c.l.s4 1934713408
        %v387 = vunpack.c.0.s8 %v386
        %v388 = vperm.slane %v382, %v387
        %v390 = vunpack.c.l.s4 1934713408
        %v391 = vunpack.c.0.s8 %v390
        %v392 = vperm.slane %v384, %v391
        %v393 = vrot.slane %v356, 4
        %v394 = vsel %vm309, %v393, %v344
        %v395 = vrot.slane %v344, 4
        %v396 = vsel %vm309, %v356, %v395
        %v398 = vunpack.c.l.s4 1934713408
        %v399 = vunpack.c.0.s8 %v398
        %v400 = vperm.slane %v394, %v399
        %v402 = vunpack.c.l.s4 1934713408
        %v403 = vunpack.c.0.s8 %v402
        %v404 = vperm.slane %v396, %v403
        %v405 = vrot.slane %v388, 4
        %v406 = vsel %vm309, %v405, %v364
        %v407 = vrot.slane %v364, 4
        %v408 = vsel %vm309, %v388, %v407
        %v409 = vrot.slane %v392, 4
        %v410 = vsel %vm309, %v409, %v368
        %v411 = vrot.slane %v368, 4
        %v412 = vsel %vm309, %v392, %v411
        %v413 = vrot.slane %v400, 4
        %v414 = vsel %vm309, %v413, %v376
        %v415 = vrot.slane %v376, 4
        %v416 = vsel %vm309, %v400, %v415
        %v417 = vrot.slane %v404, 4
        %v418 = vsel %vm309, %v417, %v380
        %v419 = vrot.slane %v380, 4
        %v420 = vsel %vm309, %v404, %v419
        %422 = vrot.lane.b32.xlu0 %v406, 124
        %v423 = vpop.permute.xlu0 %422
        %vm424 = vcmask 31744
        %v425 = vsel %vm424, %v406, 0
        %v427 = vsel %vm424, %v423, 0
        %429 = vmatpush.xpose.msra.mxu0 0.0
        %430 = vmatpush.xpose.msra.mxu0 0.0
        %431 = vmatpush.xpose.msra.mxu0 0.0
        %432 = vmatpush.xpose.msra.mxu0 0.0
        %433 = vmatpush.xpose.msra.mxu0 0.0
        %434 = vmatpush.xpose.msra.mxu0 0.0
        %435 = vmatpush.xpose.msra.mxu0 0.0
        %436 = vmatpush.xpose.msra.mxu0 0.0
        %437 = vmatpush.xpose.msra.mxu0 0.0
        %438 = vmatpush.xpose.msra.mxu0 0.0
        %439 = vmatpush.xpose.msra.mxu0 0.0
        %440 = vmatpush.xpose.msra.mxu0 0.0
        %441 = vmatpush.xpose.msra.mxu0 0.0
        %442 = vmatpush.xpose.msra.mxu0 0.0
        %443 = vmatpush.xpose.msra.mxu0 0.0
        %444 = vmatpush.xpose.msra.mxu0 %v427
        %445 = vmatmul.f32.gmra.mxu0 %v425
        %v446 = vpop.f32.mrf.mxu0
        %v447 = vadd.f32 0.0, %v446
        %448 = vdwg.mxu0
        %450 = vrot.lane.b32.xlu0 %v408, 124
        %v451 = vpop.permute.xlu0 %450
        %v452 = vsel %vm424, %v408, 0
        %v454 = vsel %vm424, %v451, 0
        %456 = vmatpush.xpose.msra.mxu0 0.0
        %457 = vmatpush.xpose.msra.mxu0 0.0
        %458 = vmatpush.xpose.msra.mxu0 0.0
        %459 = vmatpush.xpose.msra.mxu0 0.0
        %460 = vmatpush.xpose.msra.mxu0 0.0
        %461 = vmatpush.xpose.msra.mxu0 0.0
        %462 = vmatpush.xpose.msra.mxu0 0.0
        %463 = vmatpush.xpose.msra.mxu0 0.0
        %464 = vmatpush.xpose.msra.mxu0 0.0
        %465 = vmatpush.xpose.msra.mxu0 0.0
        %466 = vmatpush.xpose.msra.mxu0 0.0
        %467 = vmatpush.xpose.msra.mxu0 0.0
        %468 = vmatpush.xpose.msra.mxu0 0.0
        %469 = vmatpush.xpose.msra.mxu0 0.0
        %470 = vmatpush.xpose.msra.mxu0 0.0
        %471 = vmatpush.xpose.msra.mxu0 %v454
        %472 = vmatmul.f32.gmra.mxu0 %v452
        %v473 = vpop.f32.mrf.mxu0
        %v474 = vadd.f32 0.0, %v473
        %475 = vdwg.mxu0
        %477 = vrot.lane.b32.xlu0 %v410, 124
        %v478 = vpop.permute.xlu0 %477
        %v479 = vsel %vm424, %v410, 0
        %v481 = vsel %vm424, %v478, 0
        %483 = vmatpush.xpose.msra.mxu0 0.0
        %484 = vmatpush.xpose.msra.mxu0 0.0
        %485 = vmatpush.xpose.msra.mxu0 0.0
        %486 = vmatpush.xpose.msra.mxu0 0.0
        %487 = vmatpush.xpose.msra.mxu0 0.0
        %488 = vmatpush.xpose.msra.mxu0 0.0
        %489 = vmatpush.xpose.msra.mxu0 0.0
        %490 = vmatpush.xpose.msra.mxu0 0.0
        %491 = vmatpush.xpose.msra.mxu0 0.0
        %492 = vmatpush.xpose.msra.mxu0 0.0
        %493 = vmatpush.xpose.msra.mxu0 0.0
        %494 = vmatpush.xpose.msra.mxu0 0.0
        %495 = vmatpush.xpose.msra.mxu0 0.0
        %496 = vmatpush.xpose.msra.mxu0 0.0
        %497 = vmatpush.xpose.msra.mxu0 0.0
        %498 = vmatpush.xpose.msra.mxu0 %v481
        %499 = vmatmul.f32.gmra.mxu0 %v479
        %v500 = vpop.f32.mrf.mxu0
        %v501 = vadd.f32 0.0, %v500
        %502 = vdwg.mxu0
        %504 = vrot.lane.b32.xlu0 %v412, 124
        %v505 = vpop.permute.xlu0 %504
        %v506 = vsel %vm424, %v412, 0
        %v508 = vsel %vm424, %v505, 0
        %510 = vmatpush.xpose.msra.mxu0 0.0
        %511 = vmatpush.xpose.msra.mxu0 0.0
        %512 = vmatpush.xpose.msra.mxu0 0.0
        %513 = vmatpush.xpose.msra.mxu0 0.0
        %514 = vmatpush.xpose.msra.mxu0 0.0
        %515 = vmatpush.xpose.msra.mxu0 0.0
        %516 = vmatpush.xpose.msra.mxu0 0.0
        %517 = vmatpush.xpose.msra.mxu0 0.0
        %518 = vmatpush.xpose.msra.mxu0 0.0
        %519 = vmatpush.xpose.msra.mxu0 0.0
        %520 = vmatpush.xpose.msra.mxu0 0.0
        %521 = vmatpush.xpose.msra.mxu0 0.0
        %522 = vmatpush.xpose.msra.mxu0 0.0
        %523 = vmatpush.xpose.msra.mxu0 0.0
        %524 = vmatpush.xpose.msra.mxu0 0.0
        %525 = vmatpush.xpose.msra.mxu0 %v508
        %526 = vmatmul.f32.gmra.mxu0 %v506
        %v527 = vpop.f32.mrf.mxu0
        %v528 = vadd.f32 0.0, %v527
        %529 = vdwg.mxu0
        %531 = vrot.lane.b32.xlu0 %v414, 124
        %v532 = vpop.permute.xlu0 %531
        %v533 = vsel %vm424, %v414, 0
        %v535 = vsel %vm424, %v532, 0
        %537 = vmatpush.xpose.msra.mxu0 0.0
        %538 = vmatpush.xpose.msra.mxu0 0.0
        %539 = vmatpush.xpose.msra.mxu0 0.0
        %540 = vmatpush.xpose.msra.mxu0 0.0
        %541 = vmatpush.xpose.msra.mxu0 0.0
        %542 = vmatpush.xpose.msra.mxu0 0.0
        %543 = vmatpush.xpose.msra.mxu0 0.0
        %544 = vmatpush.xpose.msra.mxu0 0.0
        %545 = vmatpush.xpose.msra.mxu0 0.0
        %546 = vmatpush.xpose.msra.mxu0 0.0
        %547 = vmatpush.xpose.msra.mxu0 0.0
        %548 = vmatpush.xpose.msra.mxu0 0.0
        %549 = vmatpush.xpose.msra.mxu0 0.0
        %550 = vmatpush.xpose.msra.mxu0 0.0
        %551 = vmatpush.xpose.msra.mxu0 0.0
        %552 = vmatpush.xpose.msra.mxu0 %v535
        %553 = vmatmul.f32.gmra.mxu0 %v533
        %v554 = vpop.f32.mrf.mxu0
        %v555 = vadd.f32 0.0, %v554
        %556 = vdwg.mxu0
        %558 = vrot.lane.b32.xlu0 %v416, 124
        %v559 = vpop.permute.xlu0 %558
        %v560 = vsel %vm424, %v416, 0
        %v562 = vsel %vm424, %v559, 0
        %564 = vmatpush.xpose.msra.mxu0 0.0
        %565 = vmatpush.xpose.msra.mxu0 0.0
        %566 = vmatpush.xpose.msra.mxu0 0.0
        %567 = vmatpush.xpose.msra.mxu0 0.0
        %568 = vmatpush.xpose.msra.mxu0 0.0
        %569 = vmatpush.xpose.msra.mxu0 0.0
        %570 = vmatpush.xpose.msra.mxu0 0.0
        %571 = vmatpush.xpose.msra.mxu0 0.0
        %572 = vmatpush.xpose.msra.mxu0 0.0
        %573 = vmatpush.xpose.msra.mxu0 0.0
        %574 = vmatpush.xpose.msra.mxu0 0.0
        %575 = vmatpush.xpose.msra.mxu0 0.0
        %576 = vmatpush.xpose.msra.mxu0 0.0
        %577 = vmatpush.xpose.msra.mxu0 0.0
        %578 = vmatpush.xpose.msra.mxu0 0.0
        %579 = vmatpush.xpose.msra.mxu0 %v562
        %580 = vmatmul.f32.gmra.mxu0 %v560
        %v581 = vpop.f32.mrf.mxu0
        %v582 = vadd.f32 0.0, %v581
        %583 = vdwg.mxu0
        %585 = vrot.lane.b32.xlu0 %v418, 124
        %v586 = vpop.permute.xlu0 %585
        %v587 = vsel %vm424, %v418, 0
        %v589 = vsel %vm424, %v586, 0
        %591 = vmatpush.xpose.msra.mxu0 0.0
        %592 = vmatpush.xpose.msra.mxu0 0.0
        %593 = vmatpush.xpose.msra.mxu0 0.0
        %594 = vmatpush.xpose.msra.mxu0 0.0
        %595 = vmatpush.xpose.msra.mxu0 0.0
        %596 = vmatpush.xpose.msra.mxu0 0.0
        %597 = vmatpush.xpose.msra.mxu0 0.0
        %598 = vmatpush.xpose.msra.mxu0 0.0
        %599 = vmatpush.xpose.msra.mxu0 0.0
        %600 = vmatpush.xpose.msra.mxu0 0.0
        %601 = vmatpush.xpose.msra.mxu0 0.0
        %602 = vmatpush.xpose.msra.mxu0 0.0
        %603 = vmatpush.xpose.msra.mxu0 0.0
        %604 = vmatpush.xpose.msra.mxu0 0.0
        %605 = vmatpush.xpose.msra.mxu0 0.0
        %606 = vmatpush.xpose.msra.mxu0 %v589
        %607 = vmatmul.f32.gmra.mxu0 %v587
        %v608 = vpop.f32.mrf.mxu0
        %v609 = vadd.f32 0.0, %v608
        %610 = vdwg.mxu0
        %612 = vrot.lane.b32.xlu0 %v420, 124
        %v613 = vpop.permute.xlu0 %612
        %v614 = vsel %vm424, %v420, 0
        %v616 = vsel %vm424, %v613, 0
        %618 = vmatpush.xpose.msra.mxu0 0.0
        %619 = vmatpush.xpose.msra.mxu0 0.0
        %620 = vmatpush.xpose.msra.mxu0 0.0
        %621 = vmatpush.xpose.msra.mxu0 0.0
        %622 = vmatpush.xpose.msra.mxu0 0.0
        %623 = vmatpush.xpose.msra.mxu0 0.0
        %624 = vmatpush.xpose.msra.mxu0 0.0
        %625 = vmatpush.xpose.msra.mxu0 0.0
        %626 = vmatpush.xpose.msra.mxu0 0.0
        %627 = vmatpush.xpose.msra.mxu0 0.0
        %628 = vmatpush.xpose.msra.mxu0 0.0
        %629 = vmatpush.xpose.msra.mxu0 0.0
        %630 = vmatpush.xpose.msra.mxu0 0.0
        %631 = vmatpush.xpose.msra.mxu0 0.0
        %632 = vmatpush.xpose.msra.mxu0 0.0
        %633 = vmatpush.xpose.msra.mxu0 %v616
        %634 = vmatmul.f32.gmra.mxu0 %v614
        %v635 = vpop.f32.mrf.mxu0
        %v636 = vadd.f32 0.0, %v635
        %637 = vdwg.mxu0
        %vm638 = vcmask 64512
        %v639 = vsel %vm638, %v447, -inf
        %640 = vmax.xlane.f32.xlu0 %v639
        %v641 = vpop.xlane.xlu0 %640
        %v642 = vsel %vm638, %v474, -inf
        %643 = vmax.xlane.f32.xlu0 %v642
        %v644 = vpop.xlane.xlu0 %643
        %v645 = vsel %vm638, %v501, -inf
        %646 = vmax.xlane.f32.xlu0 %v645
        %v647 = vpop.xlane.xlu0 %646
        %v648 = vsel %vm638, %v528, -inf
        %649 = vmax.xlane.f32.xlu0 %v648
        %v650 = vpop.xlane.xlu0 %649
        %v651 = vsel %vm638, %v555, -inf
        %652 = vmax.xlane.f32.xlu0 %v651
        %v653 = vpop.xlane.xlu0 %652
        %v654 = vsel %vm638, %v582, -inf
        %655 = vmax.xlane.f32.xlu0 %v654
        %v656 = vpop.xlane.xlu0 %655
        %v657 = vsel %vm638, %v609, -inf
        %658 = vmax.xlane.f32.xlu0 %v657
        %v659 = vpop.xlane.xlu0 %658
        %v660 = vsel %vm638, %v636, -inf
        %661 = vmax.xlane.f32.xlu0 %v660
        %v662 = vpop.xlane.xlu0 %661
        %v663 = vsub.f32 %v447, %v641
        %v664 = vsub.f32 %v474, %v644
        %v665 = vsub.f32 %v501, %v647
        %v666 = vsub.f32 %v528, %v650
        %v667 = vsub.f32 %v555, %v653
        %v668 = vsub.f32 %v582, %v656
        %v669 = vsub.f32 %v609, %v659
        %v670 = vsub.f32 %v636, %v662
        %v671 = vmul.f32 %v663, 1.442695
        %v672 = vpow.pop %v671
        %v673 = vmul.f32 %v664, 1.442695
        %v674 = vpow.pop %v673
        %v675 = vmul.f32 %v665, 1.442695
        %v676 = vpow.pop %v675
        %v677 = vmul.f32 %v666, 1.442695
        %v678 = vpow.pop %v677
        %v679 = vmul.f32 %v667, 1.442695
        %v680 = vpow.pop %v679
        %v681 = vmul.f32 %v668, 1.442695
        %v682 = vpow.pop %v681
        %v683 = vmul.f32 %v669, 1.442695
        %v684 = vpow.pop %v683
        %v685 = vmul.f32 %v670, 1.442695
        %v686 = vpow.pop %v685
        %v687 = vsel %vm638, %v672, 0.0
        %688 = vadd.xlane.f32.xlu0 %v687
        %v689 = vpop.xlane.xlu0 %688
        %v690 = vsel %vm638, %v674, 0.0
        %691 = vadd.xlane.f32.xlu0 %v690
        %v692 = vpop.xlane.xlu0 %691
        %v693 = vsel %vm638, %v676, 0.0
        %694 = vadd.xlane.f32.xlu0 %v693
        %v695 = vpop.xlane.xlu0 %694
        %v696 = vsel %vm638, %v678, 0.0
        %697 = vadd.xlane.f32.xlu0 %v696
        %v698 = vpop.xlane.xlu0 %697
        %v699 = vsel %vm638, %v680, 0.0
        %700 = vadd.xlane.f32.xlu0 %v699
        %v701 = vpop.xlane.xlu0 %700
        %v702 = vsel %vm638, %v682, 0.0
        %703 = vadd.xlane.f32.xlu0 %v702
        %v704 = vpop.xlane.xlu0 %703
        %v705 = vsel %vm638, %v684, 0.0
        %706 = vadd.xlane.f32.xlu0 %v705
        %v707 = vpop.xlane.xlu0 %706
        %v708 = vsel %vm638, %v686, 0.0
        %709 = vadd.xlane.f32.xlu0 %v708
        %v710 = vpop.xlane.xlu0 %709
        %v711 = vrcp.pop %v689
        %v712 = vrcp.pop %v692
        %v713 = vrcp.pop %v695
        %v714 = vrcp.pop %v698
        %v715 = vrcp.pop %v701
        %v716 = vrcp.pop %v704
        %v717 = vrcp.pop %v707
        %v718 = vrcp.pop %v710
        %v719 = vmul.f32 %v672, %v711
        %v720 = vmul.f32 %v674, %v712
        %v721 = vmul.f32 %v676, %v713
        %v722 = vmul.f32 %v678, %v714
        %v723 = vmul.f32 %v680, %v715
        %v724 = vmul.f32 %v682, %v716
        %v725 = vmul.f32 %v684, %v717
        %v726 = vmul.f32 %v686, %v718
        %727 = vrot.lane.b32.xlu0 %v406, 120
        %v728 = vpop.permute.xlu0 %727
        %v731 = vsel %vm638, %v719, 0
        %733 = vmatpush.msra.mxu0 0.0
        %734 = vmatpush.msra.mxu0 0.0
        %735 = vmatpush.msra.mxu0 0.0
        %736 = vmatpush.msra.mxu0 0.0
        %737 = vmatpush.msra.mxu0 0.0
        %738 = vmatpush.msra.mxu0 0.0
        %739 = vmatpush.msra.mxu0 0.0
        %740 = vmatpush.msra.mxu0 0.0
        %741 = vmatpush.msra.mxu0 0.0
        %742 = vmatpush.msra.mxu0 0.0
        %743 = vmatpush.msra.mxu0 0.0
        %744 = vmatpush.msra.mxu0 0.0
        %745 = vmatpush.msra.mxu0 0.0
        %746 = vmatpush.msra.mxu0 0.0
        %747 = vmatpush.msra.mxu0 0.0
        %748 = vmatpush.msra.mxu0 %v728
        %749 = vmatmul.f32.gmra.mxu0 %v731
        %v750 = vpop.f32.mrf.mxu0
        %v751 = vadd.f32 0.0, %v750
        %752 = vdwg.mxu0
        %753 = vrot.lane.b32.xlu0 %v408, 120
        %v754 = vpop.permute.xlu0 %753
        %v757 = vsel %vm638, %v720, 0
        %759 = vmatpush.msra.mxu0 0.0
        %760 = vmatpush.msra.mxu0 0.0
        %761 = vmatpush.msra.mxu0 0.0
        %762 = vmatpush.msra.mxu0 0.0
        %763 = vmatpush.msra.mxu0 0.0
        %764 = vmatpush.msra.mxu0 0.0
        %765 = vmatpush.msra.mxu0 0.0
        %766 = vmatpush.msra.mxu0 0.0
        %767 = vmatpush.msra.mxu0 0.0
        %768 = vmatpush.msra.mxu0 0.0
        %769 = vmatpush.msra.mxu0 0.0
        %770 = vmatpush.msra.mxu0 0.0
        %771 = vmatpush.msra.mxu0 0.0
        %772 = vmatpush.msra.mxu0 0.0
        %773 = vmatpush.msra.mxu0 0.0
        %774 = vmatpush.msra.mxu0 %v754
        %775 = vmatmul.f32.gmra.mxu0 %v757
        %v776 = vpop.f32.mrf.mxu0
        %v777 = vadd.f32 0.0, %v776
        %778 = vdwg.mxu0
        %779 = vrot.lane.b32.xlu0 %v410, 120
        %v780 = vpop.permute.xlu0 %779
        %v783 = vsel %vm638, %v721, 0
        %785 = vmatpush.msra.mxu0 0.0
        %786 = vmatpush.msra.mxu0 0.0
        %787 = vmatpush.msra.mxu0 0.0
        %788 = vmatpush.msra.mxu0 0.0
        %789 = vmatpush.msra.mxu0 0.0
        %790 = vmatpush.msra.mxu0 0.0
        %791 = vmatpush.msra.mxu0 0.0
        %792 = vmatpush.msra.mxu0 0.0
        %793 = vmatpush.msra.mxu0 0.0
        %794 = vmatpush.msra.mxu0 0.0
        %795 = vmatpush.msra.mxu0 0.0
        %796 = vmatpush.msra.mxu0 0.0
        %797 = vmatpush.msra.mxu0 0.0
        %798 = vmatpush.msra.mxu0 0.0
        %799 = vmatpush.msra.mxu0 0.0
        %800 = vmatpush.msra.mxu0 %v780
        %801 = vmatmul.f32.gmra.mxu0 %v783
        %v802 = vpop.f32.mrf.mxu0
        %v803 = vadd.f32 0.0, %v802
        %804 = vdwg.mxu0
        %805 = vrot.lane.b32.xlu0 %v412, 120
        %v806 = vpop.permute.xlu0 %805
        %v809 = vsel %vm638, %v722, 0
        %811 = vmatpush.msra.mxu0 0.0
        %812 = vmatpush.msra.mxu0 0.0
        %813 = vmatpush.msra.mxu0 0.0
        %814 = vmatpush.msra.mxu0 0.0
        %815 = vmatpush.msra.mxu0 0.0
        %816 = vmatpush.msra.mxu0 0.0
        %817 = vmatpush.msra.mxu0 0.0
        %818 = vmatpush.msra.mxu0 0.0
        %819 = vmatpush.msra.mxu0 0.0
        %820 = vmatpush.msra.mxu0 0.0
        %821 = vmatpush.msra.mxu0 0.0
        %822 = vmatpush.msra.mxu0 0.0
        %823 = vmatpush.msra.mxu0 0.0
        %824 = vmatpush.msra.mxu0 0.0
        %825 = vmatpush.msra.mxu0 0.0
        %826 = vmatpush.msra.mxu0 %v806
        %827 = vmatmul.f32.gmra.mxu0 %v809
        %v828 = vpop.f32.mrf.mxu0
        %v829 = vadd.f32 0.0, %v828
        %830 = vdwg.mxu0
        %831 = vrot.lane.b32.xlu0 %v414, 120
        %v832 = vpop.permute.xlu0 %831
        %v835 = vsel %vm638, %v723, 0
        %837 = vmatpush.msra.mxu0 0.0
        %838 = vmatpush.msra.mxu0 0.0
        %839 = vmatpush.msra.mxu0 0.0
        %840 = vmatpush.msra.mxu0 0.0
        %841 = vmatpush.msra.mxu0 0.0
        %842 = vmatpush.msra.mxu0 0.0
        %843 = vmatpush.msra.mxu0 0.0
        %844 = vmatpush.msra.mxu0 0.0
        %845 = vmatpush.msra.mxu0 0.0
        %846 = vmatpush.msra.mxu0 0.0
        %847 = vmatpush.msra.mxu0 0.0
        %848 = vmatpush.msra.mxu0 0.0
        %849 = vmatpush.msra.mxu0 0.0
        %850 = vmatpush.msra.mxu0 0.0
        %851 = vmatpush.msra.mxu0 0.0
        %852 = vmatpush.msra.mxu0 %v832
        %853 = vmatmul.f32.gmra.mxu0 %v835
        %v854 = vpop.f32.mrf.mxu0
        %v855 = vadd.f32 0.0, %v854
        %856 = vdwg.mxu0
        %857 = vrot.lane.b32.xlu0 %v416, 120
        %v858 = vpop.permute.xlu0 %857
        %v861 = vsel %vm638, %v724, 0
        %863 = vmatpush.msra.mxu0 0.0
        %864 = vmatpush.msra.mxu0 0.0
        %865 = vmatpush.msra.mxu0 0.0
        %866 = vmatpush.msra.mxu0 0.0
        %867 = vmatpush.msra.mxu0 0.0
        %868 = vmatpush.msra.mxu0 0.0
        %869 = vmatpush.msra.mxu0 0.0
        %870 = vmatpush.msra.mxu0 0.0
        %871 = vmatpush.msra.mxu0 0.0
        %872 = vmatpush.msra.mxu0 0.0
        %873 = vmatpush.msra.mxu0 0.0
        %874 = vmatpush.msra.mxu0 0.0
        %875 = vmatpush.msra.mxu0 0.0
        %876 = vmatpush.msra.mxu0 0.0
        %877 = vmatpush.msra.mxu0 0.0
        %878 = vmatpush.msra.mxu0 %v858
        %879 = vmatmul.f32.gmra.mxu0 %v861
        %v880 = vpop.f32.mrf.mxu0
        %v881 = vadd.f32 0.0, %v880
        %882 = vdwg.mxu0
        %883 = vrot.lane.b32.xlu0 %v418, 120
        %v884 = vpop.permute.xlu0 %883
        %v887 = vsel %vm638, %v725, 0
        %889 = vmatpush.msra.mxu0 0.0
        %890 = vmatpush.msra.mxu0 0.0
        %891 = vmatpush.msra.mxu0 0.0
        %892 = vmatpush.msra.mxu0 0.0
        %893 = vmatpush.msra.mxu0 0.0
        %894 = vmatpush.msra.mxu0 0.0
        %895 = vmatpush.msra.mxu0 0.0
        %896 = vmatpush.msra.mxu0 0.0
        %897 = vmatpush.msra.mxu0 0.0
        %898 = vmatpush.msra.mxu0 0.0
        %899 = vmatpush.msra.mxu0 0.0
        %900 = vmatpush.msra.mxu0 0.0
        %901 = vmatpush.msra.mxu0 0.0
        %902 = vmatpush.msra.mxu0 0.0
        %903 = vmatpush.msra.mxu0 0.0
        %904 = vmatpush.msra.mxu0 %v884
        %905 = vmatmul.f32.gmra.mxu0 %v887
        %v906 = vpop.f32.mrf.mxu0
        %v907 = vadd.f32 0.0, %v906
        %908 = vdwg.mxu0
        %909 = vrot.lane.b32.xlu0 %v420, 120
        %v910 = vpop.permute.xlu0 %909
        %v913 = vsel %vm638, %v726, 0
        %915 = vmatpush.msra.mxu0 0.0
        %916 = vmatpush.msra.mxu0 0.0
        %917 = vmatpush.msra.mxu0 0.0
        %918 = vmatpush.msra.mxu0 0.0
        %919 = vmatpush.msra.mxu0 0.0
        %920 = vmatpush.msra.mxu0 0.0
        %921 = vmatpush.msra.mxu0 0.0
        %922 = vmatpush.msra.mxu0 0.0
        %923 = vmatpush.msra.mxu0 0.0
        %924 = vmatpush.msra.mxu0 0.0
        %925 = vmatpush.msra.mxu0 0.0
        %926 = vmatpush.msra.mxu0 0.0
        %927 = vmatpush.msra.mxu0 0.0
        %928 = vmatpush.msra.mxu0 0.0
        %929 = vmatpush.msra.mxu0 0.0
        %930 = vmatpush.msra.mxu0 %v910
        %931 = vmatmul.f32.gmra.mxu0 %v913
        %v932 = vpop.f32.mrf.mxu0
        %v933 = vadd.f32 0.0, %v932
        %934 = vdwg.mxu0
        %936 = vrot.lane.b32.xlu0 %v292, 116
        %v937 = vpop.permute.xlu0 %936
        %938 = vrot.lane.b32.xlu0 %v292, 112
        %v939 = vpop.permute.xlu0 %938
        %v940 = vsel %vm424, %v937, 0
        %v942 = vsel %vm424, %v939, 0
        %944 = vmatpush.xpose.msra.mxu0 0.0
        %945 = vmatpush.xpose.msra.mxu0 0.0
        %946 = vmatpush.xpose.msra.mxu0 0.0
        %947 = vmatpush.xpose.msra.mxu0 0.0
        %948 = vmatpush.xpose.msra.mxu0 0.0
        %949 = vmatpush.xpose.msra.mxu0 0.0
        %950 = vmatpush.xpose.msra.mxu0 0.0
        %951 = vmatpush.xpose.msra.mxu0 0.0
        %952 = vmatpush.xpose.msra.mxu0 0.0
        %953 = vmatpush.xpose.msra.mxu0 0.0
        %954 = vmatpush.xpose.msra.mxu0 0.0
        %955 = vmatpush.xpose.msra.mxu0 0.0
        %956 = vmatpush.xpose.msra.mxu0 0.0
        %957 = vmatpush.xpose.msra.mxu0 0.0
        %958 = vmatpush.xpose.msra.mxu0 0.0
        %959 = vmatpush.xpose.msra.mxu0 %v942
        %960 = vmatmul.f32.gmra.mxu0 %v940
        %v961 = vpop.f32.mrf.mxu0
        %v962 = vadd.f32 0.0, %v961
        %963 = vdwg.mxu0
        %965 = vrot.lane.b32.xlu0 %v293, 116
        %v966 = vpop.permute.xlu0 %965
        %967 = vrot.lane.b32.xlu0 %v293, 112
        %v968 = vpop.permute.xlu0 %967
        %v969 = vsel %vm424, %v966, 0
        %v971 = vsel %vm424, %v968, 0
        %973 = vmatpush.xpose.msra.mxu0 0.0
        %974 = vmatpush.xpose.msra.mxu0 0.0
        %975 = vmatpush.xpose.msra.mxu0 0.0
        %976 = vmatpush.xpose.msra.mxu0 0.0
        %977 = vmatpush.xpose.msra.mxu0 0.0
        %978 = vmatpush.xpose.msra.mxu0 0.0
        %979 = vmatpush.xpose.msra.mxu0 0.0
        %980 = vmatpush.xpose.msra.mxu0 0.0
        %981 = vmatpush.xpose.msra.mxu0 0.0
        %982 = vmatpush.xpose.msra.mxu0 0.0
        %983 = vmatpush.xpose.msra.mxu0 0.0
        %984 = vmatpush.xpose.msra.mxu0 0.0
        %985 = vmatpush.xpose.msra.mxu0 0.0
        %986 = vmatpush.xpose.msra.mxu0 0.0
        %987 = vmatpush.xpose.msra.mxu0 0.0
        %988 = vmatpush.xpose.msra.mxu0 %v971
        %989 = vmatmul.f32.gmra.mxu0 %v969
        %v990 = vpop.f32.mrf.mxu0
        %v991 = vadd.f32 0.0, %v990
        %992 = vdwg.mxu0
        %994 = vrot.lane.b32.xlu0 %v294, 116
        %v995 = vpop.permute.xlu0 %994
        %996 = vrot.lane.b32.xlu0 %v294, 112
        %v997 = vpop.permute.xlu0 %996
        %v998 = vsel %vm424, %v995, 0
        %v1000 = vsel %vm424, %v997, 0
        %1002 = vmatpush.xpose.msra.mxu0 0.0
        %1003 = vmatpush.xpose.msra.mxu0 0.0
        %1004 = vmatpush.xpose.msra.mxu0 0.0
        %1005 = vmatpush.xpose.msra.mxu0 0.0
        %1006 = vmatpush.xpose.msra.mxu0 0.0
        %1007 = vmatpush.xpose.msra.mxu0 0.0
        %1008 = vmatpush.xpose.msra.mxu0 0.0
        %1009 = vmatpush.xpose.msra.mxu0 0.0
        %1010 = vmatpush.xpose.msra.mxu0 0.0
        %1011 = vmatpush.xpose.msra.mxu0 0.0
        %1012 = vmatpush.xpose.msra.mxu0 0.0
        %1013 = vmatpush.xpose.msra.mxu0 0.0
        %1014 = vmatpush.xpose.msra.mxu0 0.0
        %1015 = vmatpush.xpose.msra.mxu0 0.0
        %1016 = vmatpush.xpose.msra.mxu0 0.0
        %1017 = vmatpush.xpose.msra.mxu0 %v1000
        %1018 = vmatmul.f32.gmra.mxu0 %v998
        %v1019 = vpop.f32.mrf.mxu0
        %v1020 = vadd.f32 0.0, %v1019
        %1021 = vdwg.mxu0
        %1023 = vrot.lane.b32.xlu0 %v295, 116
        %v1024 = vpop.permute.xlu0 %1023
        %1025 = vrot.lane.b32.xlu0 %v295, 112
        %v1026 = vpop.permute.xlu0 %1025
        %v1027 = vsel %vm424, %v1024, 0
        %v1029 = vsel %vm424, %v1026, 0
        %1031 = vmatpush.xpose.msra.mxu0 0.0
        %1032 = vmatpush.xpose.msra.mxu0 0.0
        %1033 = vmatpush.xpose.msra.mxu0 0.0
        %1034 = vmatpush.xpose.msra.mxu0 0.0
        %1035 = vmatpush.xpose.msra.mxu0 0.0
        %1036 = vmatpush.xpose.msra.mxu0 0.0
        %1037 = vmatpush.xpose.msra.mxu0 0.0
        %1038 = vmatpush.xpose.msra.mxu0 0.0
        %1039 = vmatpush.xpose.msra.mxu0 0.0
        %1040 = vmatpush.xpose.msra.mxu0 0.0
        %1041 = vmatpush.xpose.msra.mxu0 0.0
        %1042 = vmatpush.xpose.msra.mxu0 0.0
        %1043 = vmatpush.xpose.msra.mxu0 0.0
        %1044 = vmatpush.xpose.msra.mxu0 0.0
        %1045 = vmatpush.xpose.msra.mxu0 0.0
        %1046 = vmatpush.xpose.msra.mxu0 %v1029
        %1047 = vmatmul.f32.gmra.mxu0 %v1027
        %v1048 = vpop.f32.mrf.mxu0
        %v1049 = vadd.f32 0.0, %v1048
        %1050 = vdwg.mxu0
        %1052 = vrot.lane.b32.xlu0 %v296, 116
        %v1053 = vpop.permute.xlu0 %1052
        %1054 = vrot.lane.b32.xlu0 %v296, 112
        %v1055 = vpop.permute.xlu0 %1054
        %v1056 = vsel %vm424, %v1053, 0
        %v1058 = vsel %vm424, %v1055, 0
        %1060 = vmatpush.xpose.msra.mxu0 0.0
        %1061 = vmatpush.xpose.msra.mxu0 0.0
        %1062 = vmatpush.xpose.msra.mxu0 0.0
        %1063 = vmatpush.xpose.msra.mxu0 0.0
        %1064 = vmatpush.xpose.msra.mxu0 0.0
        %1065 = vmatpush.xpose.msra.mxu0 0.0
        %1066 = vmatpush.xpose.msra.mxu0 0.0
        %1067 = vmatpush.xpose.msra.mxu0 0.0
        %1068 = vmatpush.xpose.msra.mxu0 0.0
        %1069 = vmatpush.xpose.msra.mxu0 0.0
        %1070 = vmatpush.xpose.msra.mxu0 0.0
        %1071 = vmatpush.xpose.msra.mxu0 0.0
        %1072 = vmatpush.xpose.msra.mxu0 0.0
        %1073 = vmatpush.xpose.msra.mxu0 0.0
        %1074 = vmatpush.xpose.msra.mxu0 0.0
        %1075 = vmatpush.xpose.msra.mxu0 %v1058
        %1076 = vmatmul.f32.gmra.mxu0 %v1056
        %v1077 = vpop.f32.mrf.mxu0
        %v1078 = vadd.f32 0.0, %v1077
        %1079 = vdwg.mxu0
        %1081 = vrot.lane.b32.xlu0 %v297, 116
        %v1082 = vpop.permute.xlu0 %1081
        %1083 = vrot.lane.b32.xlu0 %v297, 112
        %v1084 = vpop.permute.xlu0 %1083
        %v1085 = vsel %vm424, %v1082, 0
        %v1087 = vsel %vm424, %v1084, 0
        %1089 = vmatpush.xpose.msra.mxu0 0.0
        %1090 = vmatpush.xpose.msra.mxu0 0.0
        %1091 = vmatpush.xpose.msra.mxu0 0.0
        %1092 = vmatpush.xpose.msra.mxu0 0.0
        %1093 = vmatpush.xpose.msra.mxu0 0.0
        %1094 = vmatpush.xpose.msra.mxu0 0.0
        %1095 = vmatpush.xpose.msra.mxu0 0.0
        %1096 = vmatpush.xpose.msra.mxu0 0.0
        %1097 = vmatpush.xpose.msra.mxu0 0.0
        %1098 = vmatpush.xpose.msra.mxu0 0.0
        %1099 = vmatpush.xpose.msra.mxu0 0.0
        %1100 = vmatpush.xpose.msra.mxu0 0.0
        %1101 = vmatpush.xpose.msra.mxu0 0.0
        %1102 = vmatpush.xpose.msra.mxu0 0.0
        %1103 = vmatpush.xpose.msra.mxu0 0.0
        %1104 = vmatpush.xpose.msra.mxu0 %v1087
        %1105 = vmatmul.f32.gmra.mxu0 %v1085
        %v1106 = vpop.f32.mrf.mxu0
        %v1107 = vadd.f32 0.0, %v1106
        %1108 = vdwg.mxu0
        %1110 = vrot.lane.b32.xlu0 %v298, 116
        %v1111 = vpop.permute.xlu0 %1110
        %1112 = vrot.lane.b32.xlu0 %v298, 112
        %v1113 = vpop.permute.xlu0 %1112
        %v1114 = vsel %vm424, %v1111, 0
        %v1116 = vsel %vm424, %v1113, 0
        %1118 = vmatpush.xpose.msra.mxu0 0.0
        %1119 = vmatpush.xpose.msra.mxu0 0.0
        %1120 = vmatpush.xpose.msra.mxu0 0.0
        %1121 = vmatpush.xpose.msra.mxu0 0.0
        %1122 = vmatpush.xpose.msra.mxu0 0.0
        %1123 = vmatpush.xpose.msra.mxu0 0.0
        %1124 = vmatpush.xpose.msra.mxu0 0.0
        %1125 = vmatpush.xpose.msra.mxu0 0.0
        %1126 = vmatpush.xpose.msra.mxu0 0.0
        %1127 = vmatpush.xpose.msra.mxu0 0.0
        %1128 = vmatpush.xpose.msra.mxu0 0.0
        %1129 = vmatpush.xpose.msra.mxu0 0.0
        %1130 = vmatpush.xpose.msra.mxu0 0.0
        %1131 = vmatpush.xpose.msra.mxu0 0.0
        %1132 = vmatpush.xpose.msra.mxu0 0.0
        %1133 = vmatpush.xpose.msra.mxu0 %v1116
        %1134 = vmatmul.f32.gmra.mxu0 %v1114
        %v1135 = vpop.f32.mrf.mxu0
        %v1136 = vadd.f32 0.0, %v1135
        %1137 = vdwg.mxu0
        %1139 = vrot.lane.b32.xlu0 %v299, 116
        %v1140 = vpop.permute.xlu0 %1139
        %1141 = vrot.lane.b32.xlu0 %v299, 112
        %v1142 = vpop.permute.xlu0 %1141
        %v1143 = vsel %vm424, %v1140, 0
        %v1145 = vsel %vm424, %v1142, 0
        %1147 = vmatpush.xpose.msra.mxu0 0.0
        %1148 = vmatpush.xpose.msra.mxu0 0.0
        %1149 = vmatpush.xpose.msra.mxu0 0.0
        %1150 = vmatpush.xpose.msra.mxu0 0.0
        %1151 = vmatpush.xpose.msra.mxu0 0.0
        %1152 = vmatpush.xpose.msra.mxu0 0.0
        %1153 = vmatpush.xpose.msra.mxu0 0.0
        %1154 = vmatpush.xpose.msra.mxu0 0.0
        %1155 = vmatpush.xpose.msra.mxu0 0.0
        %1156 = vmatpush.xpose.msra.mxu0 0.0
        %1157 = vmatpush.xpose.msra.mxu0 0.0
        %1158 = vmatpush.xpose.msra.mxu0 0.0
        %1159 = vmatpush.xpose.msra.mxu0 0.0
        %1160 = vmatpush.xpose.msra.mxu0 0.0
        %1161 = vmatpush.xpose.msra.mxu0 0.0
        %1162 = vmatpush.xpose.msra.mxu0 %v1145
        %1163 = vmatmul.f32.gmra.mxu0 %v1143
        %v1164 = vpop.f32.mrf.mxu0
        %v1165 = vadd.f32 0.0, %v1164
        %1166 = vdwg.mxu0
        %v1167 = vlaneseq
        %v1168 = vshrl.u32 %v1167, 7
        %v1169 = vlaneseq
        %v1170 = vand.u32 %v1169, 127
        %vm1171 = vcmp.gt.s32.totalorder %v1170, %v1168
        %v1172 = vsel %vm1171, 1, 0
        %vm1173 = vcmp.eq.s32.totalorder %v1172, 1
        %v1174 = vsel %vm1173, -3.4028235e+38, %v962
        %v1175 = vsel %vm1173, -3.4028235e+38, %v991
        %v1176 = vsel %vm1173, -3.4028235e+38, %v1020
        %v1177 = vsel %vm1173, -3.4028235e+38, %v1049
        %v1178 = vsel %vm1173, -3.4028235e+38, %v1078
        %v1179 = vsel %vm1173, -3.4028235e+38, %v1107
        %v1180 = vsel %vm1173, -3.4028235e+38, %v1136
        %v1181 = vsel %vm1173, -3.4028235e+38, %v1165
        %v1182 = vsel %vm638, %v1174, -inf
        %1183 = vmax.xlane.f32.xlu0 %v1182
        %v1184 = vpop.xlane.xlu0 %1183
        %v1185 = vsel %vm638, %v1175, -inf
        %1186 = vmax.xlane.f32.xlu0 %v1185
        %v1187 = vpop.xlane.xlu0 %1186
        %v1188 = vsel %vm638, %v1176, -inf
        %1189 = vmax.xlane.f32.xlu0 %v1188
        %v1190 = vpop.xlane.xlu0 %1189
        %v1191 = vsel %vm638, %v1177, -inf
        %1192 = vmax.xlane.f32.xlu0 %v1191
        %v1193 = vpop.xlane.xlu0 %1192
        %v1194 = vsel %vm638, %v1178, -inf
        %1195 = vmax.xlane.f32.xlu0 %v1194
        %v1196 = vpop.xlane.xlu0 %1195
        %v1197 = vsel %vm638, %v1179, -inf
        %1198 = vmax.xlane.f32.xlu0 %v1197
        %v1199 = vpop.xlane.xlu0 %1198
        %v1200 = vsel %vm638, %v1180, -inf
        %1201 = vmax.xlane.f32.xlu0 %v1200
        %v1202 = vpop.xlane.xlu0 %1201
        %v1203 = vsel %vm638, %v1181, -inf
        %1204 = vmax.xlane.f32.xlu0 %v1203
        %v1205 = vpop.xlane.xlu0 %1204
        %v1206 = vsub.f32 %v1174, %v1184
        %v1207 = vsub.f32 %v1175, %v1187
        %v1208 = vsub.f32 %v1176, %v1190
        %v1209 = vsub.f32 %v1177, %v1193
        %v1210 = vsub.f32 %v1178, %v1196
        %v1211 = vsub.f32 %v1179, %v1199
        %v1212 = vsub.f32 %v1180, %v1202
        %v1213 = vsub.f32 %v1181, %v1205
        %v1214 = vmul.f32 %v1206, 1.442695
        %v1215 = vpow.pop %v1214
        %v1216 = vmul.f32 %v1207, 1.442695
        %v1217 = vpow.pop %v1216
        %v1218 = vmul.f32 %v1208, 1.442695
        %v1219 = vpow.pop %v1218
        %v1220 = vmul.f32 %v1209, 1.442695
        %v1221 = vpow.pop %v1220
        %v1222 = vmul.f32 %v1210, 1.442695
        %v1223 = vpow.pop %v1222
        %v1224 = vmul.f32 %v1211, 1.442695
        %v1225 = vpow.pop %v1224
        %v1226 = vmul.f32 %v1212, 1.442695
        %v1227 = vpow.pop %v1226
        %v1228 = vmul.f32 %v1213, 1.442695
        %v1229 = vpow.pop %v1228
        %v1230 = vsel %vm638, %v1215, 0.0
        %1231 = vadd.xlane.f32.xlu0 %v1230
        %v1232 = vpop.xlane.xlu0 %1231
        %v1233 = vsel %vm638, %v1217, 0.0
        %1234 = vadd.xlane.f32.xlu0 %v1233
        %v1235 = vpop.xlane.xlu0 %1234
        %v1236 = vsel %vm638, %v1219, 0.0
        %1237 = vadd.xlane.f32.xlu0 %v1236
        %v1238 = vpop.xlane.xlu0 %1237
        %v1239 = vsel %vm638, %v1221, 0.0
        %1240 = vadd.xlane.f32.xlu0 %v1239
        %v1241 = vpop.xlane.xlu0 %1240
        %v1242 = vsel %vm638, %v1223, 0.0
        %1243 = vadd.xlane.f32.xlu0 %v1242
        %v1244 = vpop.xlane.xlu0 %1243
        %v1245 = vsel %vm638, %v1225, 0.0
        %1246 = vadd.xlane.f32.xlu0 %v1245
        %v1247 = vpop.xlane.xlu0 %1246
        %v1248 = vsel %vm638, %v1227, 0.0
        %1249 = vadd.xlane.f32.xlu0 %v1248
        %v1250 = vpop.xlane.xlu0 %1249
        %v1251 = vsel %vm638, %v1229, 0.0
        %1252 = vadd.xlane.f32.xlu0 %v1251
        %v1253 = vpop.xlane.xlu0 %1252
        %v1254 = vrcp.pop %v1232
        %v1255 = vrcp.pop %v1235
        %v1256 = vrcp.pop %v1238
        %v1257 = vrcp.pop %v1241
        %v1258 = vrcp.pop %v1244
        %v1259 = vrcp.pop %v1247
        %v1260 = vrcp.pop %v1250
        %v1261 = vrcp.pop %v1253
        %v1262 = vmul.f32 %v1215, %v1254
        %v1263 = vmul.f32 %v1217, %v1255
        %v1264 = vmul.f32 %v1219, %v1256
        %v1265 = vmul.f32 %v1221, %v1257
        %v1266 = vmul.f32 %v1223, %v1258
        %v1267 = vmul.f32 %v1225, %v1259
        %v1268 = vmul.f32 %v1227, %v1260
        %v1269 = vmul.f32 %v1229, %v1261
        %v1270 = vrot.slane %v803, 4
        %v1271 = vsel %vm309, %v1270, %v751
        %v1272 = vrot.slane %v751, 4
        %v1273 = vsel %vm309, %v803, %v1272
        %v1275 = vunpack.c.l.s4 1983009808
        %v1276 = vunpack.c.0.s8 %v1275
        %v1277 = vperm.slane %v1271, %v1276
        %v1279 = vunpack.c.l.s4 1983009808
        %v1280 = vunpack.c.0.s8 %v1279
        %v1281 = vperm.slane %v1273, %v1280
        %v1282 = vrot.slane %v829, 4
        %v1283 = vsel %vm309, %v1282, %v777
        %v1284 = vrot.slane %v777, 4
        %v1285 = vsel %vm309, %v829, %v1284
        %v1287 = vunpack.c.l.s4 1983009808
        %v1288 = vunpack.c.0.s8 %v1287
        %v1289 = vperm.slane %v1283, %v1288
        %v1291 = vunpack.c.l.s4 1983009808
        %v1292 = vunpack.c.0.s8 %v1291
        %v1293 = vperm.slane %v1285, %v1292
        %v1294 = vrot.slane %v907, 4
        %v1295 = vsel %vm309, %v1294, %v855
        %v1296 = vrot.slane %v855, 4
        %v1297 = vsel %vm309, %v907, %v1296
        %v1299 = vunpack.c.l.s4 1983009808
        %v1300 = vunpack.c.0.s8 %v1299
        %v1301 = vperm.slane %v1295, %v1300
        %v1303 = vunpack.c.l.s4 1983009808
        %v1304 = vunpack.c.0.s8 %v1303
        %v1305 = vperm.slane %v1297, %v1304
        %v1306 = vrot.slane %v933, 4
        %v1307 = vsel %vm309, %v1306, %v881
        %v1308 = vrot.slane %v881, 4
        %v1309 = vsel %vm309, %v933, %v1308
        %v1311 = vunpack.c.l.s4 1983009808
        %v1312 = vunpack.c.0.s8 %v1311
        %v1313 = vperm.slane %v1307, %v1312
        %v1315 = vunpack.c.l.s4 1983009808
        %v1316 = vunpack.c.0.s8 %v1315
        %v1317 = vperm.slane %v1309, %v1316
        %v1318 = vrot.slane %v1289, 4
        %v1319 = vsel %vm309, %v1318, %v1277
        %v1320 = vrot.slane %v1277, 4
        %v1321 = vsel %vm309, %v1289, %v1320
        %v1323 = vunpack.c.l.s4 1934713408
        %v1324 = vunpack.c.0.s8 %v1323
        %v1325 = vperm.slane %v1319, %v1324
        %v1327 = vunpack.c.l.s4 1934713408
        %v1328 = vunpack.c.0.s8 %v1327
        %v1329 = vperm.slane %v1321, %v1328
        %v1330 = vrot.slane %v1293, 4
        %v1331 = vsel %vm309, %v1330, %v1281
        %v1332 = vrot.slane %v1281, 4
        %v1333 = vsel %vm309, %v1293, %v1332
        %v1335 = vunpack.c.l.s4 1934713408
        %v1336 = vunpack.c.0.s8 %v1335
        %v1337 = vperm.slane %v1331, %v1336
        %v1339 = vunpack.c.l.s4 1934713408
        %v1340 = vunpack.c.0.s8 %v1339
        %v1341 = vperm.slane %v1333, %v1340
        %v1342 = vrot.slane %v1313, 4
        %v1343 = vsel %vm309, %v1342, %v1301
        %v1344 = vrot.slane %v1301, 4
        %v1345 = vsel %vm309, %v1313, %v1344
        %v1347 = vunpack.c.l.s4 1934713408
        %v1348 = vunpack.c.0.s8 %v1347
        %v1349 = vperm.slane %v1343, %v1348
        %v1351 = vunpack.c.l.s4 1934713408
        %v1352 = vunpack.c.0.s8 %v1351
        %v1353 = vperm.slane %v1345, %v1352
        %v1354 = vrot.slane %v1317, 4
        %v1355 = vsel %vm309, %v1354, %v1305
        %v1356 = vrot.slane %v1305, 4
        %v1357 = vsel %vm309, %v1317, %v1356
        %v1359 = vunpack.c.l.s4 1934713408
        %v1360 = vunpack.c.0.s8 %v1359
        %v1361 = vperm.slane %v1355, %v1360
        %v1363 = vunpack.c.l.s4 1934713408
        %v1364 = vunpack.c.0.s8 %v1363
        %v1365 = vperm.slane %v1357, %v1364
        %v1366 = vrot.slane %v1349, 4
        %v1367 = vsel %vm309, %v1366, %v1325
        %v1368 = vrot.slane %v1325, 4
        %v1369 = vsel %vm309, %v1349, %v1368
        %v1370 = vrot.slane %v1353, 4
        %v1371 = vsel %vm309, %v1370, %v1329
        %v1372 = vrot.slane %v1329, 4
        %v1373 = vsel %vm309, %v1353, %v1372
        %v1374 = vrot.slane %v1361, 4
        %v1375 = vsel %vm309, %v1374, %v1337
        %v1376 = vrot.slane %v1337, 4
        %v1377 = vsel %vm309, %v1361, %v1376
        %v1378 = vrot.slane %v1365, 4
        %v1379 = vsel %vm309, %v1378, %v1341
        %v1380 = vrot.slane %v1341, 4
        %v1381 = vsel %vm309, %v1365, %v1380
        %v1383 = vsel %vm638, %v1262, 0
        %1385 = vmatpush.msra.mxu0 0.0
        %1386 = vmatpush.msra.mxu0 0.0
        %1387 = vmatpush.msra.mxu0 0.0
        %1388 = vmatpush.msra.mxu0 0.0
        %1389 = vmatpush.msra.mxu0 0.0
        %1390 = vmatpush.msra.mxu0 0.0
        %1391 = vmatpush.msra.mxu0 0.0
        %1392 = vmatpush.msra.mxu0 0.0
        %1393 = vmatpush.msra.mxu0 0.0
        %1394 = vmatpush.msra.mxu0 0.0
        %1395 = vmatpush.msra.mxu0 0.0
        %1396 = vmatpush.msra.mxu0 0.0
        %1397 = vmatpush.msra.mxu0 0.0
        %1398 = vmatpush.msra.mxu0 0.0
        %1399 = vmatpush.msra.mxu0 0.0
        %1400 = vmatpush.msra.mxu0 %v1367
        %1401 = vmatmul.f32.gmra.mxu0 %v1383
        %v1402 = vpop.f32.mrf.mxu0
        %v1403 = vadd.f32 0.0, %v1402
        %1404 = vdwg.mxu0
        %v1406 = vsel %vm638, %v1263, 0
        %1408 = vmatpush.msra.mxu0 0.0
        %1409 = vmatpush.msra.mxu0 0.0
        %1410 = vmatpush.msra.mxu0 0.0
        %1411 = vmatpush.msra.mxu0 0.0
        %1412 = vmatpush.msra.mxu0 0.0
        %1413 = vmatpush.msra.mxu0 0.0
        %1414 = vmatpush.msra.mxu0 0.0
        %1415 = vmatpush.msra.mxu0 0.0
        %1416 = vmatpush.msra.mxu0 0.0
        %1417 = vmatpush.msra.mxu0 0.0
        %1418 = vmatpush.msra.mxu0 0.0
        %1419 = vmatpush.msra.mxu0 0.0
        %1420 = vmatpush.msra.mxu0 0.0
        %1421 = vmatpush.msra.mxu0 0.0
        %1422 = vmatpush.msra.mxu0 0.0
        %1423 = vmatpush.msra.mxu0 %v1369
        %1424 = vmatmul.f32.gmra.mxu0 %v1406
        %v1425 = vpop.f32.mrf.mxu0
        %v1426 = vadd.f32 0.0, %v1425
        %1427 = vdwg.mxu0
        %v1429 = vsel %vm638, %v1264, 0
        %1431 = vmatpush.msra.mxu0 0.0
        %1432 = vmatpush.msra.mxu0 0.0
        %1433 = vmatpush.msra.mxu0 0.0
        %1434 = vmatpush.msra.mxu0 0.0
        %1435 = vmatpush.msra.mxu0 0.0
        %1436 = vmatpush.msra.mxu0 0.0
        %1437 = vmatpush.msra.mxu0 0.0
        %1438 = vmatpush.msra.mxu0 0.0
        %1439 = vmatpush.msra.mxu0 0.0
        %1440 = vmatpush.msra.mxu0 0.0
        %1441 = vmatpush.msra.mxu0 0.0
        %1442 = vmatpush.msra.mxu0 0.0
        %1443 = vmatpush.msra.mxu0 0.0
        %1444 = vmatpush.msra.mxu0 0.0
        %1445 = vmatpush.msra.mxu0 0.0
        %1446 = vmatpush.msra.mxu0 %v1371
        %1447 = vmatmul.f32.gmra.mxu0 %v1429
        %v1448 = vpop.f32.mrf.mxu0
        %v1449 = vadd.f32 0.0, %v1448
        %1450 = vdwg.mxu0
        %v1452 = vsel %vm638, %v1265, 0
        %1454 = vmatpush.msra.mxu0 0.0
        %1455 = vmatpush.msra.mxu0 0.0
        %1456 = vmatpush.msra.mxu0 0.0
        %1457 = vmatpush.msra.mxu0 0.0
        %1458 = vmatpush.msra.mxu0 0.0
        %1459 = vmatpush.msra.mxu0 0.0
        %1460 = vmatpush.msra.mxu0 0.0
        %1461 = vmatpush.msra.mxu0 0.0
        %1462 = vmatpush.msra.mxu0 0.0
        %1463 = vmatpush.msra.mxu0 0.0
        %1464 = vmatpush.msra.mxu0 0.0
        %1465 = vmatpush.msra.mxu0 0.0
        %1466 = vmatpush.msra.mxu0 0.0
        %1467 = vmatpush.msra.mxu0 0.0
        %1468 = vmatpush.msra.mxu0 0.0
        %1469 = vmatpush.msra.mxu0 %v1373
        %1470 = vmatmul.f32.gmra.mxu0 %v1452
        %v1471 = vpop.f32.mrf.mxu0
        %v1472 = vadd.f32 0.0, %v1471
        %1473 = vdwg.mxu0
        %v1475 = vsel %vm638, %v1266, 0
        %1477 = vmatpush.msra.mxu0 0.0
        %1478 = vmatpush.msra.mxu0 0.0
        %1479 = vmatpush.msra.mxu0 0.0
        %1480 = vmatpush.msra.mxu0 0.0
        %1481 = vmatpush.msra.mxu0 0.0
        %1482 = vmatpush.msra.mxu0 0.0
        %1483 = vmatpush.msra.mxu0 0.0
        %1484 = vmatpush.msra.mxu0 0.0
        %1485 = vmatpush.msra.mxu0 0.0
        %1486 = vmatpush.msra.mxu0 0.0
        %1487 = vmatpush.msra.mxu0 0.0
        %1488 = vmatpush.msra.mxu0 0.0
        %1489 = vmatpush.msra.mxu0 0.0
        %1490 = vmatpush.msra.mxu0 0.0
        %1491 = vmatpush.msra.mxu0 0.0
        %1492 = vmatpush.msra.mxu0 %v1375
        %1493 = vmatmul.f32.gmra.mxu0 %v1475
        %v1494 = vpop.f32.mrf.mxu0
        %v1495 = vadd.f32 0.0, %v1494
        %1496 = vdwg.mxu0
        %v1498 = vsel %vm638, %v1267, 0
        %1500 = vmatpush.msra.mxu0 0.0
        %1501 = vmatpush.msra.mxu0 0.0
        %1502 = vmatpush.msra.mxu0 0.0
        %1503 = vmatpush.msra.mxu0 0.0
        %1504 = vmatpush.msra.mxu0 0.0
        %1505 = vmatpush.msra.mxu0 0.0
        %1506 = vmatpush.msra.mxu0 0.0
        %1507 = vmatpush.msra.mxu0 0.0
        %1508 = vmatpush.msra.mxu0 0.0
        %1509 = vmatpush.msra.mxu0 0.0
        %1510 = vmatpush.msra.mxu0 0.0
        %1511 = vmatpush.msra.mxu0 0.0
        %1512 = vmatpush.msra.mxu0 0.0
        %1513 = vmatpush.msra.mxu0 0.0
        %1514 = vmatpush.msra.mxu0 0.0
        %1515 = vmatpush.msra.mxu0 %v1377
        %1516 = vmatmul.f32.gmra.mxu0 %v1498
        %v1517 = vpop.f32.mrf.mxu0
        %v1518 = vadd.f32 0.0, %v1517
        %1519 = vdwg.mxu0
        %v1521 = vsel %vm638, %v1268, 0
        %1523 = vmatpush.msra.mxu0 0.0
        %1524 = vmatpush.msra.mxu0 0.0
        %1525 = vmatpush.msra.mxu0 0.0
        %1526 = vmatpush.msra.mxu0 0.0
        %1527 = vmatpush.msra.mxu0 0.0
        %1528 = vmatpush.msra.mxu0 0.0
        %1529 = vmatpush.msra.mxu0 0.0
        %1530 = vmatpush.msra.mxu0 0.0
        %1531 = vmatpush.msra.mxu0 0.0
        %1532 = vmatpush.msra.mxu0 0.0
        %1533 = vmatpush.msra.mxu0 0.0
        %1534 = vmatpush.msra.mxu0 0.0
        %1535 = vmatpush.msra.mxu0 0.0
        %1536 = vmatpush.msra.mxu0 0.0
        %1537 = vmatpush.msra.mxu0 0.0
        %1538 = vmatpush.msra.mxu0 %v1379
        %1539 = vmatmul.f32.gmra.mxu0 %v1521
        %v1540 = vpop.f32.mrf.mxu0
        %v1541 = vadd.f32 0.0, %v1540
        %1542 = vdwg.mxu0
        %v1544 = vsel %vm638, %v1269, 0
        %1546 = vmatpush.msra.mxu0 0.0
        %1547 = vmatpush.msra.mxu0 0.0
        %1548 = vmatpush.msra.mxu0 0.0
        %1549 = vmatpush.msra.mxu0 0.0
        %1550 = vmatpush.msra.mxu0 0.0
        %1551 = vmatpush.msra.mxu0 0.0
        %1552 = vmatpush.msra.mxu0 0.0
        %1553 = vmatpush.msra.mxu0 0.0
        %1554 = vmatpush.msra.mxu0 0.0
        %1555 = vmatpush.msra.mxu0 0.0
        %1556 = vmatpush.msra.mxu0 0.0
        %1557 = vmatpush.msra.mxu0 0.0
        %1558 = vmatpush.msra.mxu0 0.0
        %1559 = vmatpush.msra.mxu0 0.0
        %1560 = vmatpush.msra.mxu0 0.0
        %1561 = vmatpush.msra.mxu0 %v1381
        %1562 = vmatmul.f32.gmra.mxu0 %v1544
        %v1563 = vpop.f32.mrf.mxu0
        %v1564 = vadd.f32 0.0, %v1563
        %1565 = vdwg.mxu0
        %v1566 = vld [vmem:[%s2] sm:$0xff]
        %v1567 = vld [vmem:[%s2 + $0x8] sm:$0xff]
        %1568 = vset.pattern.permute.xlu0 2
        %1569 = vperm.xlu0 %1568, %v201
        %v1570 = vpop.permute.xlu0 %1569
        %1572 = vset.pattern.permute.xlu0 2
        %1573 = vperm.xlu0 %1572, %v202
        %v1574 = vpop.permute.xlu0 %1573
        %v1577 = vsel %vm424, %v1566, 0
        %v1580 = vsel %vm424, %v1567, 0
        %v1583 = vsel %vm424, %v1403, 0
        %v1586 = vsel %vm424, %v1426, 0
        %v1589 = vsel %vm424, %v1449, 0
        %v1592 = vsel %vm424, %v1472, 0
        %v1595 = vsel %vm424, %v1495, 0
        %v1598 = vsel %vm424, %v1518, 0
        %v1601 = vsel %vm424, %v1541, 0
        %v1604 = vsel %vm424, %v1564, 0
        %1606 = vmatpush.xpose.msra.mxu0 0.0
        %1607 = vmatpush.xpose.msra.mxu0 0.0
        %1608 = vmatpush.xpose.msra.mxu0 0.0
        %1609 = vmatpush.xpose.msra.mxu0 0.0
        %1610 = vmatpush.xpose.msra.mxu0 0.0
        %1611 = vmatpush.xpose.msra.mxu0 0.0
        %1612 = vmatpush.xpose.msra.mxu0 0.0
        %1613 = vmatpush.xpose.msra.mxu0 0.0
        %1614 = vmatpush.xpose.msra.mxu0 %v1604
        %1615 = vmatpush.xpose.msra.mxu0 %v1601
        %1616 = vmatpush.xpose.msra.mxu0 %v1598
        %1617 = vmatpush.xpose.msra.mxu0 %v1595
        %1618 = vmatpush.xpose.msra.mxu0 %v1592
        %1619 = vmatpush.xpose.msra.mxu0 %v1589
        %1620 = vmatpush.xpose.msra.mxu0 %v1586
        %1621 = vmatpush.xpose.msra.mxu0 %v1583
        %1622 = vmatmul.f32.gmra.mxu0 %v1577
        %v1623 = vpop.f32.mrf.mxu0
        %v1624 = vadd.f32 %v1570, %v1623
        %1625 = vmatmul.f32.gmra.mxu0 %v1580
        %v1626 = vpop.f32.mrf.mxu0
        %v1627 = vadd.f32 %v1574, %v1626
        %1628 = vdwg.mxu0
        %vm1629 = vcmp.ge.f32.partialorder %v1624, 0.0
        %vm1630 = vcmp.ge.f32.partialorder %v1627, 0.0
        %1631 = vset.pattern.permute.xlu0 3
        %1632 = vperm.xlu0 %1631, %v201
        %v1633 = vpop.permute.xlu0 %1632
        %1635 = vset.pattern.permute.xlu0 3
        %1636 = vperm.xlu0 %1635, %v202
        %v1637 = vpop.permute.xlu0 %1636
        %v1639 = vmul.f32 %v1633, %v1624
        %v1640 = vmul.f32 %v1637, %v1627
        %v1641 = vsel %vm1629, %v1624, %v1639
        %v1642 = vsel %vm1630, %v1627, %v1640
        %v1643 = vadd.f32 %v1641, %v196
        %v1644 = vadd.f32 %v1642, %v197
        %vm1645 = vcmask 523264
        %1646 = vst.msk [vmem:[%s190] sm:$0xff] %vm1645, %v1643
        %1647 = vst.msk [vmem:[%s190 + $0x8] sm:$0xff] %vm1645, %v1644
        %s1648 = sand.u32 %s115, 1
        %s1649 = scalar_lea.sflag [#allocation3], %s1648
        %s1650 = sand.u32 %s115, 1
        %s1651 = smul.addr %s1650, 16
        %s1652 = scalar_lea.vmem [#allocation2], %s1651
        // Predicated region
        $region37: #{tpu_custom_call.1} parent=35 // pred_check
          %p1653 = pneg %p125
        $region38: #{tpu_custom_call.1} parent=35 // pred_check_branch
          %1655 = sbr.rel (%p1653) target = $region40
        $region39: #{tpu_custom_call.1} parent=35 // pred_region
          %1657 = vsyncadd %s1649, 0
          %s1658 = smul.addr %s18, 2
          %s1659 = smul.addr %s1658, 8
          %s1660 = scalar_lea.hbm %s4, %s1659
          %s1661 = sshll.u32 %s1652, 4
          %s1662 = int_to_ptr.vmem [resolvable:$true] %s1661
          %s1663 = sshll.u32 %s1660, 4
          %s1664 = int_to_ptr.hbm [resolvable:$true] %s1663
          %1669 = dma.vmem_to_hbm [thread:$0]  %s1662, 256, %s1664, %s1649, 128, 128, 8
        $region40: #{tpu_custom_call.1} parent=35 // pred_fallthru
          _
      $region36: #{tpu_custom_call.1} parent=5 // pred_fallthru
        _
      %p1670 = scmp.le.s32.totalorder 2, %s13
      // Predicated region
      $region41: #{tpu_custom_call.1} parent=5 // pred_check
        %p1671 = pneg %p1670
      $region42: #{tpu_custom_call.1} parent=5 // pred_check_branch
        %1673 = sbr.rel (%p1671) target = $region44
      $region43: #{tpu_custom_call.1} parent=5 // pred_region
        %s1674 = ssub.s32 %s13, 2
        // Predicated region
        $region45: #{tpu_custom_call.1} parent=43 // pred_check
          %p1675 = pneg %p131
        $region46: #{tpu_custom_call.1} parent=43 // pred_check_branch
          %1677 = sbr.rel (%p1675) target = $region48
        $region47: #{tpu_custom_call.1} parent=43 // pred_region
          %s1678 = sand.u32 %s116, 1
          %s1679 = scalar_lea.sflag [#allocation3], %s1678
          %s1680 = sand.u32 %s116, 1
          %s1681 = smul.addr %s1680, 16
          %s1682 = scalar_lea.vmem [#allocation2], %s1681
          %1684 = dma.done %s1679, 256
        $region48: #{tpu_custom_call.1} parent=43 // pred_fallthru
          _
      $region44: #{tpu_custom_call.1} parent=5 // pred_fallthru
        _
    $region6: #{tpu_custom_call.1} parent=1 // loop_footer
      %s17 = sadd.s32 1, %s13
    $region7: #{tpu_custom_call.1} parent=1 // loop_footer_branch
      %12 = sbr.rel target = $region3
    $region8: #{tpu_custom_call.1} parent=1 // loop_exit
      _
    %1685 = vsyncpa [#allocation3], 1
    %s1686 = scalar_lea.sflag [#allocation3], 1
    %1687 = vsyncpa %s1686, 1

</llo_original>
